<compile_context>
chip_gen: v7x
topology: tpu7x:2x2x1
jax: 0.10.0
libtpu: 0.0.40
codegen_flags: <defaults>
</compile_context>

<pallas_src>
import jax
import jax.numpy as jnp
from jax.experimental import pallas as pl
from jax.experimental.pallas import tpu as pltpu

_LANES = 128


def _dwconv3d_plane_kernel(x0_ref, x1_ref, x2_ref, w_ref, b_ref, o_ref):
    """Computes one output depth-plane.

    x{0,1,2}_ref: (H+2, W+2, C) spatially padded input planes at depths d, d+1, d+2 of
                  the (D+2)-padded volume (i.e. the kd = 0, 1, 2 taps for output plane d).
    w_ref:        (3, 3, 3, C) depthwise weights, channels-last.
    b_ref:        (1, C)       bias.
    o_ref:        (H, W, C)    output plane.
    """
    H, W, _ = o_ref.shape
    w = w_ref[...]  # tiny (3,3,3,C); kept in its native dtype

    # One independent f32 accumulator per kd plane (VALU ILP); each chain is seeded by
    # its first tap product, so per element we do exactly 27 mul + 27 add.
    parts = []
    for kd, x_ref in enumerate((x0_ref, x1_ref, x2_ref)):
        acc = None
        for kh in range(3):
            for kw in range(3):
                # Slice the tap window straight off the ref (no full-tile f32 copy).
                # bf16 inputs stay bf16 through the multiply; only the accumulate
                # widens to f32.
                tap = x_ref[kh:kh + H, kw:kw + W, :] * w[kd, kh, kw, :]
                acc = tap.astype(jnp.float32) if acc is None else acc + tap
        parts.append(acc)

    bias = b_ref[0].astype(jnp.float32)
    out = (parts[0] + parts[1]) + (parts[2] + bias)   # bias folded in, no extra pass
    o_ref[...] = out.astype(o_ref.dtype)


def _vmem_limit_bytes(needed: int) -> int:
    try:
        phys = int(pltpu.get_tpu_info().vmem_capacity_bytes)
    except Exception:
        phys = 64 * 1024 * 1024            # conservative v7x floor if query unavailable
    cap = max(phys - 16 * 1024 * 1024, 16 * 1024 * 1024)   # leave compiler head-room
    return int(min(max(needed, 16 * 1024 * 1024), cap))


@jax.jit
def dwconv3d(x_ncdhw, weight_c333, bias_c):
    """Depthwise Conv3d(dim, dim, 3, stride=1, padding=1, groups=dim, bias=True).

    x_ncdhw:     (N, C, D, H, W)  PyTorch NCDHW input
    weight_c333: (C, 3, 3, 3)     PyTorch weight (C, 1, 3, 3, 3) squeezed
    bias_c:      (C,)
    returns:     (N, C, D, H, W)
    """
    N, C, D, H, W = x_ncdhw.shape
    pad_c = (-C) % _LANES
    Cp = C + pad_c

    # Layout plumbing (fused by XLA under jit): NCDHW -> NDHWC, zero halo on D/H/W,
    # zero-pad channels up to a lane multiple (no-op for dim=768).
    x = jnp.transpose(x_ncdhw, (0, 2, 3, 4, 1))
    x = jnp.pad(x, ((0, 0), (1, 1), (1, 1), (1, 1), (0, pad_c)))
    w = jnp.transpose(weight_c333, (1, 2, 3, 0))            # (3, 3, 3, C)
    b = bias_c
    if pad_c:
        w = jnp.pad(w, ((0, 0), (0, 0), (0, 0), (0, pad_c)))
        b = jnp.pad(b, (0, pad_c))
    b = b.reshape(1, Cp)

    # VMEM budget for the actual blocks: 3 halo planes + 1 output plane, double
    # buffered, plus f32 accumulator temporaries, weights/bias and head-room.
    isz = x.dtype.itemsize
    in_plane = (H + 2) * (W + 2) * Cp * isz
    out_plane = H * W * Cp * isz
    acc_f32 = H * W * Cp * 4
    needed = (2 * (3 * in_plane + out_plane)
              + 4 * acc_f32
              + 2 * 28 * Cp * isz
              + (4 << 20))

    def plane_spec(kd):
        return pl.BlockSpec(
            (None, None, H + 2, W + 2, Cp),
            lambda n, d, _kd=kd: (n, d + _kd, 0, 0, 0))

    out_p = pl.pallas_call(
        _dwconv3d_plane_kernel,
        out_shape=jax.ShapeDtypeStruct((N, D, H, W, Cp), x_ncdhw.dtype),
        grid=(N, D),
        in_specs=[
            plane_spec(0), plane_spec(1), plane_spec(2),
            pl.BlockSpec((3, 3, 3, Cp), lambda n, d: (0, 0, 0, 0)),
            pl.BlockSpec((1, Cp), lambda n, d: (0, 0)),
        ],
        out_specs=pl.BlockSpec((None, None, H, W, Cp),
                               lambda n, d: (n, d, 0, 0, 0)),
        compiler_params=pltpu.CompilerParams(
            dimension_semantics=("parallel", "parallel"),
            vmem_limit_bytes=_vmem_limit_bytes(needed)),
    )(x, x, x, w, b)

    if pad_c:
        out_p = out_p[..., :C]
    return jnp.transpose(out_p, (0, 4, 1, 2, 3))             # back to NCDHW


def _reference(x, weight, bias):
    C = weight.shape[0]
    return jax.lax.conv_general_dilated(
        x, weight.reshape(C, 1, 3, 3, 3),
        window_strides=(1, 1, 1),
        padding=((1, 1), (1, 1), (1, 1)),
        dimension_numbers=("NCDHW", "OIDHW", "NCDHW"),
        feature_group_count=C,
    ) + bias.reshape(1, C, 1, 1, 1)


if __name__ == "__main__":
    key = jax.random.PRNGKey(0)

    def run_case(case_key, N, C, D, H, W):
        k1, k2, k3 = jax.random.split(case_key, 3)
        x = jax.random.normal(k1, (N, C, D, H, W), jnp.float32)
        weight = jax.random.normal(k2, (C, 3, 3, 3), jnp.float32) * 0.1
        bias = jax.random.normal(k3, (C,), jnp.float32) * 0.1
        y = jax.block_until_ready(dwconv3d(x, weight, bias))
        ref = _reference(x, weight, bias)
        assert y.shape == (N, C, D, H, W)
        assert jnp.allclose(y, ref, atol=1e-4, rtol=1e-4), \
            float(jnp.max(jnp.abs(y - ref)))

    ka, kb = jax.random.split(key)
    # Small shapes consistent with the module (dim channels, 3D volume).
    run_case(ka, N=2, C=8, D=4, H=8, W=8)      # C < 128  -> lane-padded path
    run_case(kb, N=1, C=128, D=3, H=5, W=7)    # lane-dense path, odd spatial dims
    print("KERNEL_OK")
</pallas_src>

<mosaic_0001>
module attributes {stable_mosaic.version = 11 : i64} {
  func.func @_dwconv3d_plane_kernel(%arg0: i32, %arg1: i32, %arg2: memref<1x1x10x10x128xf32, #tpu.memory_space<vmem>>, %arg3: memref<1x1x10x10x128xf32, #tpu.memory_space<vmem>>, %arg4: memref<1x1x10x10x128xf32, #tpu.memory_space<vmem>>, %arg5: memref<3x3x3x128xf32, #tpu.memory_space<vmem>>, %arg6: memref<1x128xf32, #tpu.memory_space<vmem>>, %arg7: memref<1x1x8x8x128xf32, #tpu.memory_space<vmem>>) attributes {dimension_semantics = [#tpu.dimension_semantics<parallel>, #tpu.dimension_semantics<parallel>], iteration_bounds = array<i64: 2, 4>, scalar_prefetch = 0 : i64, scratch_operands = 0 : i64, tpu.core_type = #tpu.core_type<tc>, window_params = [{transform_indices = @transform_0, window_bounds = array<i64: 1, 1, 10, 10, 128>}, {transform_indices = @transform_1, window_bounds = array<i64: 1, 1, 10, 10, 128>}, {transform_indices = @transform_2, window_bounds = array<i64: 1, 1, 10, 10, 128>}, {pipeline_mode = #tpu.pipeline_mode<synchronous>, transform_indices = @transform_3, window_bounds = array<i64: 3, 3, 3, 128>}, {pipeline_mode = #tpu.pipeline_mode<synchronous>, transform_indices = @transform_4, window_bounds = array<i64: 1, 128>}, {transform_indices = @transform_5, window_bounds = array<i64: 1, 1, 8, 8, 128>}]} {
    %c0 = arith.constant 0 : index
    %c0_0 = arith.constant 0 : index
    %c0_1 = arith.constant 0 : index
    %c0_2 = arith.constant 0 : index
    %0 = vector.load %arg5[%c0, %c0_0, %c0_1, %c0_2] : memref<3x3x3x128xf32, #tpu.memory_space<vmem>>, vector<3x3x3x128xf32>
    %c0_3 = arith.constant 0 : index
    %c0_4 = arith.constant 0 : index
    %c0_5 = arith.constant 0 : index
    %c0_6 = arith.constant 0 : index
    %c0_7 = arith.constant 0 : index
    %1 = vector.load %arg2[%c0_3, %c0_4, %c0_5, %c0_6, %c0_7] : memref<1x1x10x10x128xf32, #tpu.memory_space<vmem>>, vector<1x1x8x8x128xf32>
    %2 = vector.shape_cast %1 : vector<1x1x8x8x128xf32> to vector<8x8x128xf32>
    %3 = vector.extract_strided_slice %0 {offsets = [0, 0, 0, 0], sizes = [1, 1, 1, 128], strides = [1, 1, 1, 1]} : vector<3x3x3x128xf32> to vector<1x1x1x128xf32>
    %4 = vector.shape_cast %3 : vector<1x1x1x128xf32> to vector<128xf32>
    %5 = vector.shape_cast %4 : vector<128xf32> to vector<1x1x128xf32>
    %6 = vector.broadcast %5 : vector<1x1x128xf32> to vector<8x8x128xf32>
    %7 = arith.mulf %2, %6 : vector<8x8x128xf32>
    %c0_8 = arith.constant 0 : index
    %c0_9 = arith.constant 0 : index
    %c0_10 = arith.constant 0 : index
    %c1 = arith.constant 1 : index
    %c0_11 = arith.constant 0 : index
    %8 = vector.load %arg2[%c0_8, %c0_9, %c0_10, %c1, %c0_11] : memref<1x1x10x10x128xf32, #tpu.memory_space<vmem>>, vector<1x1x8x8x128xf32>
    %9 = vector.shape_cast %8 : vector<1x1x8x8x128xf32> to vector<8x8x128xf32>
    %10 = vector.extract_strided_slice %0 {offsets = [0, 0, 1, 0], sizes = [1, 1, 1, 128], strides = [1, 1, 1, 1]} : vector<3x3x3x128xf32> to vector<1x1x1x128xf32>
    %11 = vector.shape_cast %10 : vector<1x1x1x128xf32> to vector<128xf32>
    %12 = vector.shape_cast %11 : vector<128xf32> to vector<1x1x128xf32>
    %13 = vector.broadcast %12 : vector<1x1x128xf32> to vector<8x8x128xf32>
    %14 = arith.mulf %9, %13 : vector<8x8x128xf32>
    %15 = arith.addf %7, %14 : vector<8x8x128xf32>
    %c0_12 = arith.constant 0 : index
    %c0_13 = arith.constant 0 : index
    %c0_14 = arith.constant 0 : index
    %c2 = arith.constant 2 : index
    %c0_15 = arith.constant 0 : index
    %16 = vector.load %arg2[%c0_12, %c0_13, %c0_14, %c2, %c0_15] : memref<1x1x10x10x128xf32, #tpu.memory_space<vmem>>, vector<1x1x8x8x128xf32>
    %17 = vector.shape_cast %16 : vector<1x1x8x8x128xf32> to vector<8x8x128xf32>
    %18 = vector.extract_strided_slice %0 {offsets = [0, 0, 2, 0], sizes = [1, 1, 1, 128], strides = [1, 1, 1, 1]} : vector<3x3x3x128xf32> to vector<1x1x1x128xf32>
    %19 = vector.shape_cast %18 : vector<1x1x1x128xf32> to vector<128xf32>
    %20 = vector.shape_cast %19 : vector<128xf32> to vector<1x1x128xf32>
    %21 = vector.broadcast %20 : vector<1x1x128xf32> to vector<8x8x128xf32>
    %22 = arith.mulf %17, %21 : vector<8x8x128xf32>
    %23 = arith.addf %15, %22 : vector<8x8x128xf32>
    %c0_16 = arith.constant 0 : index
    %c0_17 = arith.constant 0 : index
    %c1_18 = arith.constant 1 : index
    %c0_19 = arith.constant 0 : index
    %c0_20 = arith.constant 0 : index
    %24 = vector.load %arg2[%c0_16, %c0_17, %c1_18, %c0_19, %c0_20] : memref<1x1x10x10x128xf32, #tpu.memory_space<vmem>>, vector<1x1x8x8x128xf32>
    %25 = vector.shape_cast %24 : vector<1x1x8x8x128xf32> to vector<8x8x128xf32>
    %26 = vector.extract_strided_slice %0 {offsets = [0, 1, 0, 0], sizes = [1, 1, 1, 128], strides = [1, 1, 1, 1]} : vector<3x3x3x128xf32> to vector<1x1x1x128xf32>
    %27 = vector.shape_cast %26 : vector<1x1x1x128xf32> to vector<128xf32>
    %28 = vector.shape_cast %27 : vector<128xf32> to vector<1x1x128xf32>
    %29 = vector.broadcast %28 : vector<1x1x128xf32> to vector<8x8x128xf32>
    %30 = arith.mulf %25, %29 : vector<8x8x128xf32>
    %31 = arith.addf %23, %30 : vector<8x8x128xf32>
    %c0_21 = arith.constant 0 : index
    %c0_22 = arith.constant 0 : index
    %c1_23 = arith.constant 1 : index
    %c1_24 = arith.constant 1 : index
    %c0_25 = arith.constant 0 : index
    %32 = vector.load %arg2[%c0_21, %c0_22, %c1_23, %c1_24, %c0_25] : memref<1x1x10x10x128xf32, #tpu.memory_space<vmem>>, vector<1x1x8x8x128xf32>
    %33 = vector.shape_cast %32 : vector<1x1x8x8x128xf32> to vector<8x8x128xf32>
    %34 = vector.extract_strided_slice %0 {offsets = [0, 1, 1, 0], sizes = [1, 1, 1, 128], strides = [1, 1, 1, 1]} : vector<3x3x3x128xf32> to vector<1x1x1x128xf32>
    %35 = vector.shape_cast %34 : vector<1x1x1x128xf32> to vector<128xf32>
    %36 = vector.shape_cast %35 : vector<128xf32> to vector<1x1x128xf32>
    %37 = vector.broadcast %36 : vector<1x1x128xf32> to vector<8x8x128xf32>
    %38 = arith.mulf %33, %37 : vector<8x8x128xf32>
    %39 = arith.addf %31, %38 : vector<8x8x128xf32>
    %c0_26 = arith.constant 0 : index
    %c0_27 = arith.constant 0 : index
    %c1_28 = arith.constant 1 : index
    %c2_29 = arith.constant 2 : index
    %c0_30 = arith.constant 0 : index
    %40 = vector.load %arg2[%c0_26, %c0_27, %c1_28, %c2_29, %c0_30] : memref<1x1x10x10x128xf32, #tpu.memory_space<vmem>>, vector<1x1x8x8x128xf32>
    %41 = vector.shape_cast %40 : vector<1x1x8x8x128xf32> to vector<8x8x128xf32>
    %42 = vector.extract_strided_slice %0 {offsets = [0, 1, 2, 0], sizes = [1, 1, 1, 128], strides = [1, 1, 1, 1]} : vector<3x3x3x128xf32> to vector<1x1x1x128xf32>
    %43 = vector.shape_cast %42 : vector<1x1x1x128xf32> to vector<128xf32>
    %44 = vector.shape_cast %43 : vector<128xf32> to vector<1x1x128xf32>
    %45 = vector.broadcast %44 : vector<1x1x128xf32> to vector<8x8x128xf32>
    %46 = arith.mulf %41, %45 : vector<8x8x128xf32>
    %47 = arith.addf %39, %46 : vector<8x8x128xf32>
    %c0_31 = arith.constant 0 : index
    %c0_32 = arith.constant 0 : index
    %c2_33 = arith.constant 2 : index
    %c0_34 = arith.constant 0 : index
    %c0_35 = arith.constant 0 : index
    %48 = vector.load %arg2[%c0_31, %c0_32, %c2_33, %c0_34, %c0_35] : memref<1x1x10x10x128xf32, #tpu.memory_space<vmem>>, vector<1x1x8x8x128xf32>
    %49 = vector.shape_cast %48 : vector<1x1x8x8x128xf32> to vector<8x8x128xf32>
    %50 = vector.extract_strided_slice %0 {offsets = [0, 2, 0, 0], sizes = [1, 1, 1, 128], strides = [1, 1, 1, 1]} : vector<3x3x3x128xf32> to vector<1x1x1x128xf32>
    %51 = vector.shape_cast %50 : vector<1x1x1x128xf32> to vector<128xf32>
    %52 = vector.shape_cast %51 : vector<128xf32> to vector<1x1x128xf32>
    %53 = vector.broadcast %52 : vector<1x1x128xf32> to vector<8x8x128xf32>
    %54 = arith.mulf %49, %53 : vector<8x8x128xf32>
    %55 = arith.addf %47, %54 : vector<8x8x128xf32>
    %c0_36 = arith.constant 0 : index
    %c0_37 = arith.constant 0 : index
    %c2_38 = arith.constant 2 : index
    %c1_39 = arith.constant 1 : index
    %c0_40 = arith.constant 0 : index
    %56 = vector.load %arg2[%c0_36, %c0_37, %c2_38, %c1_39, %c0_40] : memref<1x1x10x10x128xf32, #tpu.memory_space<vmem>>, vector<1x1x8x8x128xf32>
    %57 = vector.shape_cast %56 : vector<1x1x8x8x128xf32> to vector<8x8x128xf32>
    %58 = vector.extract_strided_slice %0 {offsets = [0, 2, 1, 0], sizes = [1, 1, 1, 128], strides = [1, 1, 1, 1]} : vector<3x3x3x128xf32> to vector<1x1x1x128xf32>
    %59 = vector.shape_cast %58 : vector<1x1x1x128xf32> to vector<128xf32>
    %60 = vector.shape_cast %59 : vector<128xf32> to vector<1x1x128xf32>
    %61 = vector.broadcast %60 : vector<1x1x128xf32> to vector<8x8x128xf32>
    %62 = arith.mulf %57, %61 : vector<8x8x128xf32>
    %63 = arith.addf %55, %62 : vector<8x8x128xf32>
    %c0_41 = arith.constant 0 : index
    %c0_42 = arith.constant 0 : index
    %c2_43 = arith.constant 2 : index
    %c2_44 = arith.constant 2 : index
    %c0_45 = arith.constant 0 : index
    %64 = vector.load %arg2[%c0_41, %c0_42, %c2_43, %c2_44, %c0_45] : memref<1x1x10x10x128xf32, #tpu.memory_space<vmem>>, vector<1x1x8x8x128xf32>
    %65 = vector.shape_cast %64 : vector<1x1x8x8x128xf32> to vector<8x8x128xf32>
    %66 = vector.extract_strided_slice %0 {offsets = [0, 2, 2, 0], sizes = [1, 1, 1, 128], strides = [1, 1, 1, 1]} : vector<3x3x3x128xf32> to vector<1x1x1x128xf32>
    %67 = vector.shape_cast %66 : vector<1x1x1x128xf32> to vector<128xf32>
    %68 = vector.shape_cast %67 : vector<128xf32> to vector<1x1x128xf32>
    %69 = vector.broadcast %68 : vector<1x1x128xf32> to vector<8x8x128xf32>
    %70 = arith.mulf %65, %69 : vector<8x8x128xf32>
    %71 = arith.addf %63, %70 : vector<8x8x128xf32>
    %c0_46 = arith.constant 0 : index
    %c0_47 = arith.constant 0 : index
    %c0_48 = arith.constant 0 : index
    %c0_49 = arith.constant 0 : index
    %c0_50 = arith.constant 0 : index
    %72 = vector.load %arg3[%c0_46, %c0_47, %c0_48, %c0_49, %c0_50] : memref<1x1x10x10x128xf32, #tpu.memory_space<vmem>>, vector<1x1x8x8x128xf32>
    %73 = vector.shape_cast %72 : vector<1x1x8x8x128xf32> to vector<8x8x128xf32>
    %74 = vector.extract_strided_slice %0 {offsets = [1, 0, 0, 0], sizes = [1, 1, 1, 128], strides = [1, 1, 1, 1]} : vector<3x3x3x128xf32> to vector<1x1x1x128xf32>
    %75 = vector.shape_cast %74 : vector<1x1x1x128xf32> to vector<128xf32>
    %76 = vector.shape_cast %75 : vector<128xf32> to vector<1x1x128xf32>
    %77 = vector.broadcast %76 : vector<1x1x128xf32> to vector<8x8x128xf32>
    %78 = arith.mulf %73, %77 : vector<8x8x128xf32>
    %c0_51 = arith.constant 0 : index
    %c0_52 = arith.constant 0 : index
    %c0_53 = arith.constant 0 : index
    %c1_54 = arith.constant 1 : index
    %c0_55 = arith.constant 0 : index
    %79 = vector.load %arg3[%c0_51, %c0_52, %c0_53, %c1_54, %c0_55] : memref<1x1x10x10x128xf32, #tpu.memory_space<vmem>>, vector<1x1x8x8x128xf32>
    %80 = vector.shape_cast %79 : vector<1x1x8x8x128xf32> to vector<8x8x128xf32>
    %81 = vector.extract_strided_slice %0 {offsets = [1, 0, 1, 0], sizes = [1, 1, 1, 128], strides = [1, 1, 1, 1]} : vector<3x3x3x128xf32> to vector<1x1x1x128xf32>
    %82 = vector.shape_cast %81 : vector<1x1x1x128xf32> to vector<128xf32>
    %83 = vector.shape_cast %82 : vector<128xf32> to vector<1x1x128xf32>
    %84 = vector.broadcast %83 : vector<1x1x128xf32> to vector<8x8x128xf32>
    %85 = arith.mulf %80, %84 : vector<8x8x128xf32>
    %86 = arith.addf %78, %85 : vector<8x8x128xf32>
    %c0_56 = arith.constant 0 : index
    %c0_57 = arith.constant 0 : index
    %c0_58 = arith.constant 0 : index
    %c2_59 = arith.constant 2 : index
    %c0_60 = arith.constant 0 : index
    %87 = vector.load %arg3[%c0_56, %c0_57, %c0_58, %c2_59, %c0_60] : memref<1x1x10x10x128xf32, #tpu.memory_space<vmem>>, vector<1x1x8x8x128xf32>
    %88 = vector.shape_cast %87 : vector<1x1x8x8x128xf32> to vector<8x8x128xf32>
    %89 = vector.extract_strided_slice %0 {offsets = [1, 0, 2, 0], sizes = [1, 1, 1, 128], strides = [1, 1, 1, 1]} : vector<3x3x3x128xf32> to vector<1x1x1x128xf32>
    %90 = vector.shape_cast %89 : vector<1x1x1x128xf32> to vector<128xf32>
    %91 = vector.shape_cast %90 : vector<128xf32> to vector<1x1x128xf32>
    %92 = vector.broadcast %91 : vector<1x1x128xf32> to vector<8x8x128xf32>
    %93 = arith.mulf %88, %92 : vector<8x8x128xf32>
    %94 = arith.addf %86, %93 : vector<8x8x128xf32>
    %c0_61 = arith.constant 0 : index
    %c0_62 = arith.constant 0 : index
    %c1_63 = arith.constant 1 : index
    %c0_64 = arith.constant 0 : index
    %c0_65 = arith.constant 0 : index
    %95 = vector.load %arg3[%c0_61, %c0_62, %c1_63, %c0_64, %c0_65] : memref<1x1x10x10x128xf32, #tpu.memory_space<vmem>>, vector<1x1x8x8x128xf32>
    %96 = vector.shape_cast %95 : vector<1x1x8x8x128xf32> to vector<8x8x128xf32>
    %97 = vector.extract_strided_slice %0 {offsets = [1, 1, 0, 0], sizes = [1, 1, 1, 128], strides = [1, 1, 1, 1]} : vector<3x3x3x128xf32> to vector<1x1x1x128xf32>
    %98 = vector.shape_cast %97 : vector<1x1x1x128xf32> to vector<128xf32>
    %99 = vector.shape_cast %98 : vector<128xf32> to vector<1x1x128xf32>
    %100 = vector.broadcast %99 : vector<1x1x128xf32> to vector<8x8x128xf32>
    %101 = arith.mulf %96, %100 : vector<8x8x128xf32>
    %102 = arith.addf %94, %101 : vector<8x8x128xf32>
    %c0_66 = arith.constant 0 : index
    %c0_67 = arith.constant 0 : index
    %c1_68 = arith.constant 1 : index
    %c1_69 = arith.constant 1 : index
    %c0_70 = arith.constant 0 : index
    %103 = vector.load %arg3[%c0_66, %c0_67, %c1_68, %c1_69, %c0_70] : memref<1x1x10x10x128xf32, #tpu.memory_space<vmem>>, vector<1x1x8x8x128xf32>
    %104 = vector.shape_cast %103 : vector<1x1x8x8x128xf32> to vector<8x8x128xf32>
    %105 = vector.extract_strided_slice %0 {offsets = [1, 1, 1, 0], sizes = [1, 1, 1, 128], strides = [1, 1, 1, 1]} : vector<3x3x3x128xf32> to vector<1x1x1x128xf32>
    %106 = vector.shape_cast %105 : vector<1x1x1x128xf32> to vector<128xf32>
    %107 = vector.shape_cast %106 : vector<128xf32> to vector<1x1x128xf32>
    %108 = vector.broadcast %107 : vector<1x1x128xf32> to vector<8x8x128xf32>
    %109 = arith.mulf %104, %108 : vector<8x8x128xf32>
    %110 = arith.addf %102, %109 : vector<8x8x128xf32>
    %c0_71 = arith.constant 0 : index
    %c0_72 = arith.constant 0 : index
    %c1_73 = arith.constant 1 : index
    %c2_74 = arith.constant 2 : index
    %c0_75 = arith.constant 0 : index
    %111 = vector.load %arg3[%c0_71, %c0_72, %c1_73, %c2_74, %c0_75] : memref<1x1x10x10x128xf32, #tpu.memory_space<vmem>>, vector<1x1x8x8x128xf32>
    %112 = vector.shape_cast %111 : vector<1x1x8x8x128xf32> to vector<8x8x128xf32>
    %113 = vector.extract_strided_slice %0 {offsets = [1, 1, 2, 0], sizes = [1, 1, 1, 128], strides = [1, 1, 1, 1]} : vector<3x3x3x128xf32> to vector<1x1x1x128xf32>
    %114 = vector.shape_cast %113 : vector<1x1x1x128xf32> to vector<128xf32>
    %115 = vector.shape_cast %114 : vector<128xf32> to vector<1x1x128xf32>
    %116 = vector.broadcast %115 : vector<1x1x128xf32> to vector<8x8x128xf32>
    %117 = arith.mulf %112, %116 : vector<8x8x128xf32>
    %118 = arith.addf %110, %117 : vector<8x8x128xf32>
    %c0_76 = arith.constant 0 : index
    %c0_77 = arith.constant 0 : index
    %c2_78 = arith.constant 2 : index
    %c0_79 = arith.constant 0 : index
    %c0_80 = arith.constant 0 : index
    %119 = vector.load %arg3[%c0_76, %c0_77, %c2_78, %c0_79, %c0_80] : memref<1x1x10x10x128xf32, #tpu.memory_space<vmem>>, vector<1x1x8x8x128xf32>
    %120 = vector.shape_cast %119 : vector<1x1x8x8x128xf32> to vector<8x8x128xf32>
    %121 = vector.extract_strided_slice %0 {offsets = [1, 2, 0, 0], sizes = [1, 1, 1, 128], strides = [1, 1, 1, 1]} : vector<3x3x3x128xf32> to vector<1x1x1x128xf32>
    %122 = vector.shape_cast %121 : vector<1x1x1x128xf32> to vector<128xf32>
    %123 = vector.shape_cast %122 : vector<128xf32> to vector<1x1x128xf32>
    %124 = vector.broadcast %123 : vector<1x1x128xf32> to vector<8x8x128xf32>
    %125 = arith.mulf %120, %124 : vector<8x8x128xf32>
    %126 = arith.addf %118, %125 : vector<8x8x128xf32>
    %c0_81 = arith.constant 0 : index
    %c0_82 = arith.constant 0 : index
    %c2_83 = arith.constant 2 : index
    %c1_84 = arith.constant 1 : index
    %c0_85 = arith.constant 0 : index
    %127 = vector.load %arg3[%c0_81, %c0_82, %c2_83, %c1_84, %c0_85] : memref<1x1x10x10x128xf32, #tpu.memory_space<vmem>>, vector<1x1x8x8x128xf32>
    %128 = vector.shape_cast %127 : vector<1x1x8x8x128xf32> to vector<8x8x128xf32>
    %129 = vector.extract_strided_slice %0 {offsets = [1, 2, 1, 0], sizes = [1, 1, 1, 128], strides = [1, 1, 1, 1]} : vector<3x3x3x128xf32> to vector<1x1x1x128xf32>
    %130 = vector.shape_cast %129 : vector<1x1x1x128xf32> to vector<128xf32>
    %131 = vector.shape_cast %130 : vector<128xf32> to vector<1x1x128xf32>
    %132 = vector.broadcast %131 : vector<1x1x128xf32> to vector<8x8x128xf32>
    %133 = arith.mulf %128, %132 : vector<8x8x128xf32>
    %134 = arith.addf %126, %133 : vector<8x8x128xf32>
    %c0_86 = arith.constant 0 : index
    %c0_87 = arith.constant 0 : index
    %c2_88 = arith.constant 2 : index
    %c2_89 = arith.constant 2 : index
    %c0_90 = arith.constant 0 : index
    %135 = vector.load %arg3[%c0_86, %c0_87, %c2_88, %c2_89, %c0_90] : memref<1x1x10x10x128xf32, #tpu.memory_space<vmem>>, vector<1x1x8x8x128xf32>
    %136 = vector.shape_cast %135 : vector<1x1x8x8x128xf32> to vector<8x8x128xf32>
    %137 = vector.extract_strided_slice %0 {offsets = [1, 2, 2, 0], sizes = [1, 1, 1, 128], strides = [1, 1, 1, 1]} : vector<3x3x3x128xf32> to vector<1x1x1x128xf32>
    %138 = vector.shape_cast %137 : vector<1x1x1x128xf32> to vector<128xf32>
    %139 = vector.shape_cast %138 : vector<128xf32> to vector<1x1x128xf32>
    %140 = vector.broadcast %139 : vector<1x1x128xf32> to vector<8x8x128xf32>
    %141 = arith.mulf %136, %140 : vector<8x8x128xf32>
    %142 = arith.addf %134, %141 : vector<8x8x128xf32>
    %c0_91 = arith.constant 0 : index
    %c0_92 = arith.constant 0 : index
    %c0_93 = arith.constant 0 : index
    %c0_94 = arith.constant 0 : index
    %c0_95 = arith.constant 0 : index
    %143 = vector.load %arg4[%c0_91, %c0_92, %c0_93, %c0_94, %c0_95] : memref<1x1x10x10x128xf32, #tpu.memory_space<vmem>>, vector<1x1x8x8x128xf32>
    %144 = vector.shape_cast %143 : vector<1x1x8x8x128xf32> to vector<8x8x128xf32>
    %145 = vector.extract_strided_slice %0 {offsets = [2, 0, 0, 0], sizes = [1, 1, 1, 128], strides = [1, 1, 1, 1]} : vector<3x3x3x128xf32> to vector<1x1x1x128xf32>
    %146 = vector.shape_cast %145 : vector<1x1x1x128xf32> to vector<128xf32>
    %147 = vector.shape_cast %146 : vector<128xf32> to vector<1x1x128xf32>
    %148 = vector.broadcast %147 : vector<1x1x128xf32> to vector<8x8x128xf32>
    %149 = arith.mulf %144, %148 : vector<8x8x128xf32>
    %c0_96 = arith.constant 0 : index
    %c0_97 = arith.constant 0 : index
    %c0_98 = arith.constant 0 : index
    %c1_99 = arith.constant 1 : index
    %c0_100 = arith.constant 0 : index
    %150 = vector.load %arg4[%c0_96, %c0_97, %c0_98, %c1_99, %c0_100] : memref<1x1x10x10x128xf32, #tpu.memory_space<vmem>>, vector<1x1x8x8x128xf32>
    %151 = vector.shape_cast %150 : vector<1x1x8x8x128xf32> to vector<8x8x128xf32>
    %152 = vector.extract_strided_slice %0 {offsets = [2, 0, 1, 0], sizes = [1, 1, 1, 128], strides = [1, 1, 1, 1]} : vector<3x3x3x128xf32> to vector<1x1x1x128xf32>
    %153 = vector.shape_cast %152 : vector<1x1x1x128xf32> to vector<128xf32>
    %154 = vector.shape_cast %153 : vector<128xf32> to vector<1x1x128xf32>
    %155 = vector.broadcast %154 : vector<1x1x128xf32> to vector<8x8x128xf32>
    %156 = arith.mulf %151, %155 : vector<8x8x128xf32>
    %157 = arith.addf %149, %156 : vector<8x8x128xf32>
    %c0_101 = arith.constant 0 : index
    %c0_102 = arith.constant 0 : index
    %c0_103 = arith.constant 0 : index
    %c2_104 = arith.constant 2 : index
    %c0_105 = arith.constant 0 : index
    %158 = vector.load %arg4[%c0_101, %c0_102, %c0_103, %c2_104, %c0_105] : memref<1x1x10x10x128xf32, #tpu.memory_space<vmem>>, vector<1x1x8x8x128xf32>
    %159 = vector.shape_cast %158 : vector<1x1x8x8x128xf32> to vector<8x8x128xf32>
    %160 = vector.extract_strided_slice %0 {offsets = [2, 0, 2, 0], sizes = [1, 1, 1, 128], strides = [1, 1, 1, 1]} : vector<3x3x3x128xf32> to vector<1x1x1x128xf32>
    %161 = vector.shape_cast %160 : vector<1x1x1x128xf32> to vector<128xf32>
    %162 = vector.shape_cast %161 : vector<128xf32> to vector<1x1x128xf32>
    %163 = vector.broadcast %162 : vector<1x1x128xf32> to vector<8x8x128xf32>
    %164 = arith.mulf %159, %163 : vector<8x8x128xf32>
    %165 = arith.addf %157, %164 : vector<8x8x128xf32>
    %c0_106 = arith.constant 0 : index
    %c0_107 = arith.constant 0 : index
    %c1_108 = arith.constant 1 : index
    %c0_109 = arith.constant 0 : index
    %c0_110 = arith.constant 0 : index
    %166 = vector.load %arg4[%c0_106, %c0_107, %c1_108, %c0_109, %c0_110] : memref<1x1x10x10x128xf32, #tpu.memory_space<vmem>>, vector<1x1x8x8x128xf32>
    %167 = vector.shape_cast %166 : vector<1x1x8x8x128xf32> to vector<8x8x128xf32>
    %168 = vector.extract_strided_slice %0 {offsets = [2, 1, 0, 0], sizes = [1, 1, 1, 128], strides = [1, 1, 1, 1]} : vector<3x3x3x128xf32> to vector<1x1x1x128xf32>
    %169 = vector.shape_cast %168 : vector<1x1x1x128xf32> to vector<128xf32>
    %170 = vector.shape_cast %169 : vector<128xf32> to vector<1x1x128xf32>
    %171 = vector.broadcast %170 : vector<1x1x128xf32> to vector<8x8x128xf32>
    %172 = arith.mulf %167, %171 : vector<8x8x128xf32>
    %173 = arith.addf %165, %172 : vector<8x8x128xf32>
    %c0_111 = arith.constant 0 : index
    %c0_112 = arith.constant 0 : index
    %c1_113 = arith.constant 1 : index
    %c1_114 = arith.constant 1 : index
    %c0_115 = arith.constant 0 : index
    %174 = vector.load %arg4[%c0_111, %c0_112, %c1_113, %c1_114, %c0_115] : memref<1x1x10x10x128xf32, #tpu.memory_space<vmem>>, vector<1x1x8x8x128xf32>
    %175 = vector.shape_cast %174 : vector<1x1x8x8x128xf32> to vector<8x8x128xf32>
    %176 = vector.extract_strided_slice %0 {offsets = [2, 1, 1, 0], sizes = [1, 1, 1, 128], strides = [1, 1, 1, 1]} : vector<3x3x3x128xf32> to vector<1x1x1x128xf32>
    %177 = vector.shape_cast %176 : vector<1x1x1x128xf32> to vector<128xf32>
    %178 = vector.shape_cast %177 : vector<128xf32> to vector<1x1x128xf32>
    %179 = vector.broadcast %178 : vector<1x1x128xf32> to vector<8x8x128xf32>
    %180 = arith.mulf %175, %179 : vector<8x8x128xf32>
    %181 = arith.addf %173, %180 : vector<8x8x128xf32>
    %c0_116 = arith.constant 0 : index
    %c0_117 = arith.constant 0 : index
    %c1_118 = arith.constant 1 : index
    %c2_119 = arith.constant 2 : index
    %c0_120 = arith.constant 0 : index
    %182 = vector.load %arg4[%c0_116, %c0_117, %c1_118, %c2_119, %c0_120] : memref<1x1x10x10x128xf32, #tpu.memory_space<vmem>>, vector<1x1x8x8x128xf32>
    %183 = vector.shape_cast %182 : vector<1x1x8x8x128xf32> to vector<8x8x128xf32>
    %184 = vector.extract_strided_slice %0 {offsets = [2, 1, 2, 0], sizes = [1, 1, 1, 128], strides = [1, 1, 1, 1]} : vector<3x3x3x128xf32> to vector<1x1x1x128xf32>
    %185 = vector.shape_cast %184 : vector<1x1x1x128xf32> to vector<128xf32>
    %186 = vector.shape_cast %185 : vector<128xf32> to vector<1x1x128xf32>
    %187 = vector.broadcast %186 : vector<1x1x128xf32> to vector<8x8x128xf32>
    %188 = arith.mulf %183, %187 : vector<8x8x128xf32>
    %189 = arith.addf %181, %188 : vector<8x8x128xf32>
    %c0_121 = arith.constant 0 : index
    %c0_122 = arith.constant 0 : index
    %c2_123 = arith.constant 2 : index
    %c0_124 = arith.constant 0 : index
    %c0_125 = arith.constant 0 : index
    %190 = vector.load %arg4[%c0_121, %c0_122, %c2_123, %c0_124, %c0_125] : memref<1x1x10x10x128xf32, #tpu.memory_space<vmem>>, vector<1x1x8x8x128xf32>
    %191 = vector.shape_cast %190 : vector<1x1x8x8x128xf32> to vector<8x8x128xf32>
    %192 = vector.extract_strided_slice %0 {offsets = [2, 2, 0, 0], sizes = [1, 1, 1, 128], strides = [1, 1, 1, 1]} : vector<3x3x3x128xf32> to vector<1x1x1x128xf32>
    %193 = vector.shape_cast %192 : vector<1x1x1x128xf32> to vector<128xf32>
    %194 = vector.shape_cast %193 : vector<128xf32> to vector<1x1x128xf32>
    %195 = vector.broadcast %194 : vector<1x1x128xf32> to vector<8x8x128xf32>
    %196 = arith.mulf %191, %195 : vector<8x8x128xf32>
    %197 = arith.addf %189, %196 : vector<8x8x128xf32>
    %c0_126 = arith.constant 0 : index
    %c0_127 = arith.constant 0 : index
    %c2_128 = arith.constant 2 : index
    %c1_129 = arith.constant 1 : index
    %c0_130 = arith.constant 0 : index
    %198 = vector.load %arg4[%c0_126, %c0_127, %c2_128, %c1_129, %c0_130] : memref<1x1x10x10x128xf32, #tpu.memory_space<vmem>>, vector<1x1x8x8x128xf32>
    %199 = vector.shape_cast %198 : vector<1x1x8x8x128xf32> to vector<8x8x128xf32>
    %200 = vector.extract_strided_slice %0 {offsets = [2, 2, 1, 0], sizes = [1, 1, 1, 128], strides = [1, 1, 1, 1]} : vector<3x3x3x128xf32> to vector<1x1x1x128xf32>
    %201 = vector.shape_cast %200 : vector<1x1x1x128xf32> to vector<128xf32>
    %202 = vector.shape_cast %201 : vector<128xf32> to vector<1x1x128xf32>
    %203 = vector.broadcast %202 : vector<1x1x128xf32> to vector<8x8x128xf32>
    %204 = arith.mulf %199, %203 : vector<8x8x128xf32>
    %205 = arith.addf %197, %204 : vector<8x8x128xf32>
    %c0_131 = arith.constant 0 : index
    %c0_132 = arith.constant 0 : index
    %c2_133 = arith.constant 2 : index
    %c2_134 = arith.constant 2 : index
    %c0_135 = arith.constant 0 : index
    %206 = vector.load %arg4[%c0_131, %c0_132, %c2_133, %c2_134, %c0_135] : memref<1x1x10x10x128xf32, #tpu.memory_space<vmem>>, vector<1x1x8x8x128xf32>
    %207 = vector.shape_cast %206 : vector<1x1x8x8x128xf32> to vector<8x8x128xf32>
    %208 = vector.extract_strided_slice %0 {offsets = [2, 2, 2, 0], sizes = [1, 1, 1, 128], strides = [1, 1, 1, 1]} : vector<3x3x3x128xf32> to vector<1x1x1x128xf32>
    %209 = vector.shape_cast %208 : vector<1x1x1x128xf32> to vector<128xf32>
    %210 = vector.shape_cast %209 : vector<128xf32> to vector<1x1x128xf32>
    %211 = vector.broadcast %210 : vector<1x1x128xf32> to vector<8x8x128xf32>
    %212 = arith.mulf %207, %211 : vector<8x8x128xf32>
    %213 = arith.addf %205, %212 : vector<8x8x128xf32>
    %c0_136 = arith.constant 0 : index
    %c0_137 = arith.constant 0 : index
    %214 = vector.load %arg6[%c0_136, %c0_137] : memref<1x128xf32, #tpu.memory_space<vmem>>, vector<1x128xf32>
    %215 = vector.shape_cast %214 : vector<1x128xf32> to vector<128xf32>
    %216 = arith.addf %71, %142 : vector<8x8x128xf32>
    %217 = vector.shape_cast %215 : vector<128xf32> to vector<1x1x128xf32>
    %218 = vector.broadcast %217 : vector<1x1x128xf32> to vector<8x8x128xf32>
    %219 = arith.addf %213, %218 : vector<8x8x128xf32>
    %220 = arith.addf %216, %219 : vector<8x8x128xf32>
    %c0_138 = arith.constant 0 : index
    %c0_139 = arith.constant 0 : index
    %c0_140 = arith.constant 0 : index
    %c0_141 = arith.constant 0 : index
    %c0_142 = arith.constant 0 : index
    %221 = vector.load %arg7[%c0_138, %c0_139, %c0_140, %c0_141, %c0_142] : memref<1x1x8x8x128xf32, #tpu.memory_space<vmem>>, vector<1x1x8x8x128xf32>
    %222 = vector.shape_cast %221 : vector<1x1x8x8x128xf32> to vector<8x8x128xf32>
    %223 = vector.shape_cast %220 : vector<8x8x128xf32> to vector<1x1x8x8x128xf32>
    tpu.vector_store %arg7[%c0_138, %c0_139, %c0_140, %c0_141, %c0_142], %223 {strides = array<i32>} : memref<1x1x8x8x128xf32, #tpu.memory_space<vmem>>, vector<1x1x8x8x128xf32>,
    return
  }
  func.func @transform_0(%arg0: i32, %arg1: i32) -> (i32, i32, i32, i32, i32) {
    %c0_i32 = arith.constant 0 : i32
    %0 = arith.addi %arg1, %c0_i32 : i32
    %c0_i32_0 = arith.constant 0 : i32
    %c0_i32_1 = arith.constant 0 : i32
    %c0_i32_2 = arith.constant 0 : i32
    %c0_i32_3 = arith.constant 0 : i32
    return %arg0, %0, %c0_i32_0, %c0_i32_1, %c0_i32_2 : i32, i32, i32, i32, i32
  }
  func.func @transform_1(%arg0: i32, %arg1: i32) -> (i32, i32, i32, i32, i32) {
    %c1_i32 = arith.constant 1 : i32
    %0 = arith.addi %arg1, %c1_i32 : i32
    %c0_i32 = arith.constant 0 : i32
    %c0_i32_0 = arith.constant 0 : i32
    %c0_i32_1 = arith.constant 0 : i32
    %c0_i32_2 = arith.constant 0 : i32
    return %arg0, %0, %c0_i32, %c0_i32_0, %c0_i32_1 : i32, i32, i32, i32, i32
  }
  func.func @transform_2(%arg0: i32, %arg1: i32) -> (i32, i32, i32, i32, i32) {
    %c2_i32 = arith.constant 2 : i32
    %0 = arith.addi %arg1, %c2_i32 : i32
    %c0_i32 = arith.constant 0 : i32
    %c0_i32_0 = arith.constant 0 : i32
    %c0_i32_1 = arith.constant 0 : i32
    %c0_i32_2 = arith.constant 0 : i32
    return %arg0, %0, %c0_i32, %c0_i32_0, %c0_i32_1 : i32, i32, i32, i32, i32
  }
  func.func @transform_3(%arg0: i32, %arg1: i32) -> (i32, i32, i32, i32) {
    %c0_i32 = arith.constant 0 : i32
    %c0_i32_0 = arith.constant 0 : i32
    %c0_i32_1 = arith.constant 0 : i32
    %c0_i32_2 = arith.constant 0 : i32
    %c0_i32_3 = arith.constant 0 : i32
    return %c0_i32, %c0_i32_0, %c0_i32_1, %c0_i32_2 : i32, i32, i32, i32
  }
  func.func @transform_4(%arg0: i32, %arg1: i32) -> (i32, i32) {
    %c0_i32 = arith.constant 0 : i32
    %c0_i32_0 = arith.constant 0 : i32
    %c0_i32_1 = arith.constant 0 : i32
    return %c0_i32, %c0_i32_0 : i32, i32
  }
  func.func @transform_5(%arg0: i32, %arg1: i32) -> (i32, i32, i32, i32, i32) {
    %c0_i32 = arith.constant 0 : i32
    %c0_i32_0 = arith.constant 0 : i32
    %c0_i32_1 = arith.constant 0 : i32
    %c0_i32_2 = arith.constant 0 : i32
    return %arg0, %arg1, %c0_i32, %c0_i32_0, %c0_i32_1 : i32, i32, i32, i32, i32
  }
}

</mosaic_0001>

<llo_original>
// kernel: dwconv3d.1
$region0: #{dwconv3d.1}
  #allocation0 [shape = 'u32[]', space=smem, size = 0x4, offset = 0x4, fixed_abs, tag = 'smem constant byte address 0x4 - core index']
  #allocation1 [shape = 'u32[144,128]{1,0:T(1,128)}', space=vmem, size = 0x12000, scoped, tag = 'internal scratch']
  %s0 = inlined_call_operand.vmem [shape: f32[2,6,10,10,128], index: 0, kind: input, shape index: {}, may-alias: {0,1,2}]
  %s1 = inlined_call_operand.vmem [shape: f32[2,6,10,10,128], index: 1, kind: input, shape index: {}, may-alias: {0,1,2}]
  %s2 = inlined_call_operand.vmem [shape: f32[2,6,10,10,128], index: 2, kind: input, shape index: {}, may-alias: {0,1,2}]
  %s3 = inlined_call_operand.vmem [shape: f32[3,3,3,128], index: 3, kind: input, shape index: {}]
  %s4 = inlined_call_operand.vmem [shape: f32[1,128], index: 4, kind: input, shape index: {}]
  %s5 = inlined_call_operand.vmem [shape: f32[2,4,8,8,128], index: 5, kind: output, shape index: {}]
  %s6 = sld [smem:[#allocation0]]
  $region53: #{dwconv3d.1} parent=0
    _
  %s8 = ssub.s32 1, %s6
  %s9 = scalar_select 0, %s8, %s6
  loop: start=0, step=1, limit=10
  $region2: #{dwconv3d.1} parent=0 // loop_pre_header
    _
  $region3: #{dwconv3d.1} parent=0 // loop_header
    %s11 = sphi 0, %s15
    %p12 = scmp.ge.s32.totalorder %s11, 10
    %s18 = sphi 0, %s30
    %s19 = sphi 0, %s26
    %s20 = sphi 0, %s18
    %s21 = sphi 0, %s19
    %s22 = sphi 0, %s20
    %s23 = sphi 0, %s21
    %s35 = sphi 0, %s37
    %s38 = sphi 0, %s35
    %s39 = sphi 0, %s38
    %s55 = sphi 0, %s39
    %s65 = sphi 0, %s67
    %s68 = sphi 0, %s65
    %s69 = sphi 0, %s68
    %s85 = sphi 0, %s69
    %s95 = sphi 0, %s97
    %s98 = sphi 0, %s95
    %s99 = sphi 0, %s98
    %s115 = sphi 0, %s99
    %s119 = sphi 0, %s119
    %s121 = sphi 0, %s119
    %s122 = sphi 0, %s121
    %s136 = sphi 0, %s122
    %s140 = sphi 0, %s140
    %s142 = sphi 0, %s140
    %s143 = sphi 0, %s142
    %s157 = sphi 0, %s143
    %s165 = sphi 0, %s167
    %s168 = sphi 0, %s165
    %s169 = sphi 0, %s168
    %s185 = sphi 0, %s169
  $region4: #{dwconv3d.1} parent=0 // loop_header_branch
    %14 = sbr.rel (%p12) target = $region8
  $region5: #{dwconv3d.1} parent=0 // loop_body
    %s16 = ssub.s32 %s11, 1
    %s17 = ssub.s32 %s11, 2
    %s24 = sadd.s32 1, %s19
    %p25 = scmp.ge.s32.totalorder %s24, 4
    %s26 = scalar_select %p25, 0, %s24
    %s27 = sadd.s32 1, %s18
    %s28 = scalar_select %p25, %s27, %s18
    %p29 = scmp.ge.s32.totalorder %s28, 2
    %s30 = scalar_select %p29, 0, %s28
    %s31 = ssub.s32 %s18, %s30
    %s32 = ssub.s32 %s19, %s26
    %s33 = sor.u32 %s31, %s32
    %p34 = scmp.eq.s32.totalorder %s33, 0
    %s36 = sadd.s32 %s35, 1
    %s37 = scalar_select %p34, %s35, %s36
    %p40 = pneg %p34
    %p41 = scmp.eq.s32.totalorder %s11, 7
    %p42 = por %p40, %p41
    %p43 = scmp.ne.s32.totalorder %s35, %s38
    %p44 = scmp.eq.s32.totalorder %s11, 0
    %p45 = por %p43, %p44
    %p46 = scmp.ne.s32.totalorder %s35, %s38
    %p47 = scmp.eq.s32.totalorder %s16, 7
    %p48 = por %p46, %p47
    %p49 = scmp.ne.s32.totalorder %s38, %s39
    %p50 = scmp.eq.s32.totalorder %s16, 0
    %p51 = por %p49, %p50
    %p52 = scmp.ne.s32.totalorder %s38, %s39
    %p53 = scmp.eq.s32.totalorder %s17, 7
    %p54 = por %p52, %p53
    %p56 = scmp.ne.s32.totalorder %s39, %s55
    %p57 = scmp.eq.s32.totalorder %s17, 0
    %p58 = por %p56, %p57
    %s59 = sadd.s32 %s19, 1
    %s60 = sadd.s32 %s26, 1
    %s61 = ssub.s32 %s18, %s30
    %s62 = ssub.s32 %s59, %s60
    %s63 = sor.u32 %s61, %s62
    %p64 = scmp.eq.s32.totalorder %s63, 0
    %s66 = sadd.s32 %s65, 1
    %s67 = scalar_select %p64, %s65, %s66
    %p70 = pneg %p64
    %p71 = scmp.eq.s32.totalorder %s11, 7
    %p72 = por %p70, %p71
    %p73 = scmp.ne.s32.totalorder %s65, %s68
    %p74 = scmp.eq.s32.totalorder %s11, 0
    %p75 = por %p73, %p74
    %p76 = scmp.ne.s32.totalorder %s65, %s68
    %p77 = scmp.eq.s32.totalorder %s16, 7
    %p78 = por %p76, %p77
    %p79 = scmp.ne.s32.totalorder %s68, %s69
    %p80 = scmp.eq.s32.totalorder %s16, 0
    %p81 = por %p79, %p80
    %p82 = scmp.ne.s32.totalorder %s68, %s69
    %p83 = scmp.eq.s32.totalorder %s17, 7
    %p84 = por %p82, %p83
    %p86 = scmp.ne.s32.totalorder %s69, %s85
    %p87 = scmp.eq.s32.totalorder %s17, 0
    %p88 = por %p86, %p87
    %s89 = sadd.s32 %s19, 2
    %s90 = sadd.s32 %s26, 2
    %s91 = ssub.s32 %s18, %s30
    %s92 = ssub.s32 %s89, %s90
    %s93 = sor.u32 %s91, %s92
    %p94 = scmp.eq.s32.totalorder %s93, 0
    %s96 = sadd.s32 %s95, 1
    %s97 = scalar_select %p94, %s95, %s96
    %p100 = pneg %p94
    %p101 = scmp.eq.s32.totalorder %s11, 7
    %p102 = por %p100, %p101
    %p103 = scmp.ne.s32.totalorder %s95, %s98
    %p104 = scmp.eq.s32.totalorder %s11, 0
    %p105 = por %p103, %p104
    %p106 = scmp.ne.s32.totalorder %s95, %s98
    %p107 = scmp.eq.s32.totalorder %s16, 7
    %p108 = por %p106, %p107
    %p109 = scmp.ne.s32.totalorder %s98, %s99
    %p110 = scmp.eq.s32.totalorder %s16, 0
    %p111 = por %p109, %p110
    %p112 = scmp.ne.s32.totalorder %s98, %s99
    %p113 = scmp.eq.s32.totalorder %s17, 7
    %p114 = por %p112, %p113
    %p116 = scmp.ne.s32.totalorder %s99, %s115
    %p117 = scmp.eq.s32.totalorder %s17, 0
    %p118 = por %p116, %p117
    %s120 = sadd.s32 %s119, 1
    %p123 = scmp.eq.s32.totalorder %s11, 7
    %p124 = scmp.ne.s32.totalorder %s119, %s121
    %p125 = scmp.eq.s32.totalorder %s11, 0
    %p126 = por %p124, %p125
    %p127 = scmp.ne.s32.totalorder %s119, %s121
    %p128 = scmp.eq.s32.totalorder %s16, 7
    %p129 = por %p127, %p128
    %p130 = scmp.ne.s32.totalorder %s121, %s122
    %p131 = scmp.eq.s32.totalorder %s16, 0
    %p132 = por %p130, %p131
    %p133 = scmp.ne.s32.totalorder %s121, %s122
    %p134 = scmp.eq.s32.totalorder %s17, 7
    %p135 = por %p133, %p134
    %p137 = scmp.ne.s32.totalorder %s122, %s136
    %p138 = scmp.eq.s32.totalorder %s17, 0
    %p139 = por %p137, %p138
    %s141 = sadd.s32 %s140, 1
    %p144 = scmp.eq.s32.totalorder %s11, 7
    %p145 = scmp.ne.s32.totalorder %s140, %s142
    %p146 = scmp.eq.s32.totalorder %s11, 0
    %p147 = por %p145, %p146
    %p148 = scmp.ne.s32.totalorder %s140, %s142
    %p149 = scmp.eq.s32.totalorder %s16, 7
    %p150 = por %p148, %p149
    %p151 = scmp.ne.s32.totalorder %s142, %s143
    %p152 = scmp.eq.s32.totalorder %s16, 0
    %p153 = por %p151, %p152
    %p154 = scmp.ne.s32.totalorder %s142, %s143
    %p155 = scmp.eq.s32.totalorder %s17, 7
    %p156 = por %p154, %p155
    %p158 = scmp.ne.s32.totalorder %s143, %s157
    %p159 = scmp.eq.s32.totalorder %s17, 0
    %p160 = por %p158, %p159
    %s161 = ssub.s32 %s18, %s30
    %s162 = ssub.s32 %s19, %s26
    %s163 = sor.u32 %s161, %s162
    %p164 = scmp.eq.s32.totalorder %s163, 0
    %s166 = sadd.s32 %s165, 1
    %s167 = scalar_select %p164, %s165, %s166
    %p170 = pneg %p164
    %p171 = scmp.eq.s32.totalorder %s11, 7
    %p172 = por %p170, %p171
    %p173 = scmp.ne.s32.totalorder %s165, %s168
    %p174 = scmp.eq.s32.totalorder %s11, 0
    %p175 = por %p173, %p174
    %p176 = scmp.ne.s32.totalorder %s165, %s168
    %p177 = scmp.eq.s32.totalorder %s16, 7
    %p178 = por %p176, %p177
    %p179 = scmp.ne.s32.totalorder %s168, %s169
    %p180 = scmp.eq.s32.totalorder %s16, 0
    %p181 = por %p179, %p180
    %p182 = scmp.ne.s32.totalorder %s168, %s169
    %p183 = scmp.eq.s32.totalorder %s17, 7
    %p184 = por %p182, %p183
    %p186 = scmp.ne.s32.totalorder %s169, %s185
    %p187 = scmp.eq.s32.totalorder %s17, 0
    %p188 = por %p186, %p187
    %p189 = scmp.le.s32.totalorder 1, %s11
    %p190 = scmp.lt.s32.totalorder %s11, 9
    %p191 = pnand %p189, %p190
    %p192 = pneg %p191
    // Predicated region
    $region9: #{dwconv3d.1} parent=5 // pred_check
      _
    $region10: #{dwconv3d.1} parent=5 // pred_check_branch
      %194 = sbr.rel (%p191) target = $region12
    $region11: #{dwconv3d.1} parent=5 // pred_region
      %s195 = ssub.s32 %s11, 1
      // Predicated region
      $region13: #{dwconv3d.1} parent=11 // pred_check
        %p196 = pneg %p132
      $region14: #{dwconv3d.1} parent=11 // pred_check_branch
        %198 = sbr.rel (%p196) target = $region16
      $region15: #{dwconv3d.1} parent=11 // pred_region
        _
      $region16: #{dwconv3d.1} parent=11 // pred_fallthru
        _
      // Predicated region
      $region17: #{dwconv3d.1} parent=11 // pred_check
        %p199 = pneg %p153
      $region18: #{dwconv3d.1} parent=11 // pred_check_branch
        %201 = sbr.rel (%p199) target = $region20
      $region19: #{dwconv3d.1} parent=11 // pred_region
        _
      $region20: #{dwconv3d.1} parent=11 // pred_fallthru
        _
    $region12: #{dwconv3d.1} parent=5 // pred_fallthru
      _
    %p202 = scmp.lt.s32.totalorder %s11, 8
    // Predicated region
    $region21: #{dwconv3d.1} parent=5 // pred_check
      %p203 = pneg %p202
    $region22: #{dwconv3d.1} parent=5 // pred_check_branch
      %205 = sbr.rel (%p203) target = $region24
    $region23: #{dwconv3d.1} parent=5 // pred_region
      // Predicated region
      $region25: #{dwconv3d.1} parent=23 // pred_check
        %p206 = pneg %p45
      $region26: #{dwconv3d.1} parent=23 // pred_check_branch
        %208 = sbr.rel (%p206) target = $region28
      $region27: #{dwconv3d.1} parent=23 // pred_region
        %p209 = scmp.lt.s32.totalorder %s18, 1
        %s210 = scalar_select %p209, %s18, 1
        %p211 = scmp.lt.s32.totalorder %s19, 5
        %s212 = scalar_select %p211, %s19, 5
        %s213 = smul.addr %s212, 20
        %s214 = smul.addr %s210, 120
        %s215 = sadd.s32 %s213, %s214
        %s216 = smul.addr %s215, 8
        %s217 = scalar_lea.vmem %s0, %s216
      $region28: #{dwconv3d.1} parent=23 // pred_fallthru
        _
      // Predicated region
      $region29: #{dwconv3d.1} parent=23 // pred_check
        %p218 = pneg %p75
      $region30: #{dwconv3d.1} parent=23 // pred_check_branch
        %220 = sbr.rel (%p218) target = $region32
      $region31: #{dwconv3d.1} parent=23 // pred_region
        %s221 = sadd.s32 %s19, 1
        %p222 = scmp.lt.s32.totalorder %s18, 1
        %s223 = scalar_select %p222, %s18, 1
        %p224 = scmp.lt.s32.totalorder %s221, 5
        %s225 = scalar_select %p224, %s221, 5
        %s226 = smul.addr %s225, 20
        %s227 = smul.addr %s223, 120
        %s228 = sadd.s32 %s226, %s227
        %s229 = smul.addr %s228, 8
        %s230 = scalar_lea.vmem %s1, %s229
        %s231 = sadd.s32 %s19, 1
      $region32: #{dwconv3d.1} parent=23 // pred_fallthru
        _
      // Predicated region
      $region33: #{dwconv3d.1} parent=23 // pred_check
        %p232 = pneg %p105
      $region34: #{dwconv3d.1} parent=23 // pred_check_branch
        %234 = sbr.rel (%p232) target = $region36
      $region35: #{dwconv3d.1} parent=23 // pred_region
        %s235 = sadd.s32 %s19, 2
        %p236 = scmp.lt.s32.totalorder %s18, 1
        %s237 = scalar_select %p236, %s18, 1
        %p238 = scmp.lt.s32.totalorder %s235, 5
        %s239 = scalar_select %p238, %s235, 5
        %s240 = smul.addr %s239, 20
        %s241 = smul.addr %s237, 120
        %s242 = sadd.s32 %s240, %s241
        %s243 = smul.addr %s242, 8
        %s244 = scalar_lea.vmem %s2, %s243
        %s245 = sadd.s32 %s19, 2
      $region36: #{dwconv3d.1} parent=23 // pred_fallthru
        _
    $region24: #{dwconv3d.1} parent=5 // pred_fallthru
      _
    %p246 = scmp.le.s32.totalorder 1, %s11
    %p247 = scmp.lt.s32.totalorder %s11, 9
    %p248 = pnand %p246, %p247
    %p249 = pneg %p248
    // Predicated region
    $region37: #{dwconv3d.1} parent=5 // pred_check
      _
    $region38: #{dwconv3d.1} parent=5 // pred_check_branch
      %251 = sbr.rel (%p248) target = $region40
    $region39: #{dwconv3d.1} parent=5 // pred_region
      %s252 = ssub.s32 %s11, 1
      %p253 = scmp.lt.s32.totalorder %s20, 1
      %s254 = scalar_select %p253, %s20, 1
      %p255 = scmp.lt.s32.totalorder %s21, 5
      %s256 = scalar_select %p255, %s21, 5
      %s257 = smul.addr %s256, 20
      %s258 = smul.addr %s254, 120
      %s259 = sadd.s32 %s257, %s258
      %s260 = smul.addr %s259, 8
      %s261 = scalar_lea.vmem %s0, %s260
      %p262 = pneg %p51
      %p263 = pneg %p48
      %s264 = sadd.s32 %s21, 1
      %p265 = scmp.lt.s32.totalorder %s20, 1
      %s266 = scalar_select %p265, %s20, 1
      %p267 = scmp.lt.s32.totalorder %s264, 5
      %s268 = scalar_select %p267, %s264, 5
      %s269 = smul.addr %s268, 20
      %s270 = smul.addr %s266, 120
      %s271 = sadd.s32 %s269, %s270
      %s272 = smul.addr %s271, 8
      %s273 = scalar_lea.vmem %s1, %s272
      %p274 = pneg %p81
      %p275 = pneg %p78
      %s276 = sadd.s32 %s21, 2
      %p277 = scmp.lt.s32.totalorder %s20, 1
      %s278 = scalar_select %p277, %s20, 1
      %p279 = scmp.lt.s32.totalorder %s276, 5
      %s280 = scalar_select %p279, %s276, 5
      %s281 = smul.addr %s280, 20
      %s282 = smul.addr %s278, 120
      %s283 = sadd.s32 %s281, %s282
      %s284 = smul.addr %s283, 8
      %s285 = scalar_lea.vmem %s2, %s284
      %p286 = pneg %p111
      %p287 = pneg %p108
      %p288 = pneg %p132
      %p289 = pneg %p129
      %p290 = pneg %p153
      %p291 = pneg %p150
      %p292 = pneg %p181
      %p293 = pneg %p178
      %p294 = scmp.lt.s32.totalorder %s20, 1
      %s295 = scalar_select %p294, %s20, 1
      %p296 = scmp.lt.s32.totalorder %s21, 3
      %s297 = scalar_select %p296, %s21, 3
      %s298 = smul.addr %s297, 8
      %s299 = smul.addr %s295, 32
      %s300 = sadd.s32 %s298, %s299
      %s301 = smul.addr %s300, 8
      %s302 = scalar_lea.vmem %s5, %s301
      %p303 = scmp.lt.s32.totalorder %s20, 1
      %s304 = scalar_select %p303, %s20, 1
      %p305 = scmp.lt.s32.totalorder %s21, 5
      %s306 = scalar_select %p305, %s21, 5
      %s307 = smul.addr %s306, 20
      %s308 = smul.addr %s304, 120
      %s309 = sadd.s32 %s307, %s308
      %s310 = smul.addr %s309, 8
      %s311 = scalar_lea.vmem %s0, %s310
      %s312 = sadd.s32 %s21, 1
      %p313 = scmp.lt.s32.totalorder %s20, 1
      %s314 = scalar_select %p313, %s20, 1
      %p315 = scmp.lt.s32.totalorder %s312, 5
      %s316 = scalar_select %p315, %s312, 5
      %s317 = smul.addr %s316, 20
      %s318 = smul.addr %s314, 120
      %s319 = sadd.s32 %s317, %s318
      %s320 = smul.addr %s319, 8
      %s321 = scalar_lea.vmem %s1, %s320
      %s322 = sadd.s32 %s21, 1
      %s323 = sadd.s32 %s21, 2
      %p324 = scmp.lt.s32.totalorder %s20, 1
      %s325 = scalar_select %p324, %s20, 1
      %p326 = scmp.lt.s32.totalorder %s323, 5
      %s327 = scalar_select %p326, %s323, 5
      %s328 = smul.addr %s327, 20
      %s329 = smul.addr %s325, 120
      %s330 = sadd.s32 %s328, %s329
      %s331 = smul.addr %s330, 8
      %s332 = scalar_lea.vmem %s2, %s331
      %s333 = sadd.s32 %s21, 2
      %p334 = scmp.lt.s32.totalorder %s20, 1
      %s335 = scalar_select %p334, %s20, 1
      %p336 = scmp.lt.s32.totalorder %s21, 3
      %s337 = scalar_select %p336, %s21, 3
      %s338 = smul.addr %s337, 8
      %s339 = smul.addr %s335, 32
      %s340 = sadd.s32 %s338, %s339
      %s341 = smul.addr %s340, 8
      %s342 = scalar_lea.vmem %s5, %s341
      %v343 = vld [vmem:[%s3] sm:$0x7]
      %v344 = vld [vmem:[%s3 + $0x4] sm:$0x7]
      %v345 = vld [vmem:[%s3 + $0x8] sm:$0x7]
      %v346 = vld [vmem:[%s3 + $0xc] sm:$0x7]
      %v347 = vld [vmem:[%s3 + $0x10] sm:$0x7]
      %v348 = vld [vmem:[%s3 + $0x14] sm:$0x7]
      %v349 = vld [vmem:[%s3 + $0x18] sm:$0x7]
      %v350 = vld [vmem:[%s3 + $0x1c] sm:$0x7]
      %v351 = vld [vmem:[%s3 + $0x20] sm:$0x7]
      %v352 = vld [vmem:[%s311] sm:$0xff]
      %v353 = vld [vmem:[%s311 + $0x10] sm:$0xff]
      %v354 = vld [vmem:[%s311 + $0x20] sm:$0xff]
      %v355 = vld [vmem:[%s311 + $0x30] sm:$0xff]
      %v356 = vld [vmem:[%s311 + $0x40] sm:$0xff]
      %v357 = vld [vmem:[%s311 + $0x50] sm:$0xff]
      %v358 = vld [vmem:[%s311 + $0x60] sm:$0xff]
      %v359 = vld [vmem:[%s311 + $0x70] sm:$0xff]
      %v360 = vlaneseq
      %v361 = vshrl.u32 %v360, 7
      %v362 = vsub.s32 0, %v361
      %v363 = vrot.slane %v343, %v362
      %v364 = vmul.f32 %v352, %v363
      %v365 = vmul.f32 %v353, %v363
      %v366 = vmul.f32 %v354, %v363
      %v367 = vmul.f32 %v355, %v363
      %v368 = vmul.f32 %v356, %v363
      %v369 = vmul.f32 %v357, %v363
      %v370 = vmul.f32 %v358, %v363
      %v371 = vmul.f32 %v359, %v363
      %v372 = vld [vmem:[%s311 + $0x1] sm:$0xff]
      %v373 = vld [vmem:[%s311 + $0x11] sm:$0xff]
      %v374 = vld [vmem:[%s311 + $0x21] sm:$0xff]
      %v375 = vld [vmem:[%s311 + $0x31] sm:$0xff]
      %v376 = vld [vmem:[%s311 + $0x41] sm:$0xff]
      %v377 = vld [vmem:[%s311 + $0x51] sm:$0xff]
      %v378 = vld [vmem:[%s311 + $0x61] sm:$0xff]
      %v379 = vld [vmem:[%s311 + $0x71] sm:$0xff]
      %v380 = vlaneseq
      %v381 = vshrl.u32 %v380, 7
      %v382 = vsub.s32 1, %v381
      %v383 = vrot.slane %v343, %v382
      %v384 = vmul.f32 %v372, %v383
      %v385 = vmul.f32 %v373, %v383
      %v386 = vmul.f32 %v374, %v383
      %v387 = vmul.f32 %v375, %v383
      %v388 = vmul.f32 %v376, %v383
      %v389 = vmul.f32 %v377, %v383
      %v390 = vmul.f32 %v378, %v383
      %v391 = vmul.f32 %v379, %v383
      %v392 = vadd.f32 %v364, %v384
      %v393 = vadd.f32 %v365, %v385
      %v394 = vadd.f32 %v366, %v386
      %v395 = vadd.f32 %v367, %v387
      %v396 = vadd.f32 %v368, %v388
      %v397 = vadd.f32 %v369, %v389
      %v398 = vadd.f32 %v370, %v390
      %v399 = vadd.f32 %v371, %v391
      %v400 = vld [vmem:[%s311 + $0x2] sm:$0xff]
      %v401 = vld [vmem:[%s311 + $0x12] sm:$0xff]
      %v402 = vld [vmem:[%s311 + $0x22] sm:$0xff]
      %v403 = vld [vmem:[%s311 + $0x32] sm:$0xff]
      %v404 = vld [vmem:[%s311 + $0x42] sm:$0xff]
      %v405 = vld [vmem:[%s311 + $0x52] sm:$0xff]
      %v406 = vld [vmem:[%s311 + $0x62] sm:$0xff]
      %v407 = vld [vmem:[%s311 + $0x72] sm:$0xff]
      %v408 = vlaneseq
      %v409 = vshrl.u32 %v408, 7
      %v410 = vsub.s32 2, %v409
      %v411 = vrot.slane %v343, %v410
      %v412 = vmul.f32 %v400, %v411
      %v413 = vmul.f32 %v401, %v411
      %v414 = vmul.f32 %v402, %v411
      %v415 = vmul.f32 %v403, %v411
      %v416 = vmul.f32 %v404, %v411
      %v417 = vmul.f32 %v405, %v411
      %v418 = vmul.f32 %v406, %v411
      %v419 = vmul.f32 %v407, %v411
      %v420 = vadd.f32 %v392, %v412
      %v421 = vadd.f32 %v393, %v413
      %v422 = vadd.f32 %v394, %v414
      %v423 = vadd.f32 %v395, %v415
      %v424 = vadd.f32 %v396, %v416
      %v425 = vadd.f32 %v397, %v417
      %v426 = vadd.f32 %v398, %v418
      %v427 = vadd.f32 %v399, %v419
      %s428 = scalar_lea.vmem %s311, 16
      %v429 = vld [vmem:[%s428] sm:$0xff]
      %v430 = vld [vmem:[%s428 + $0x10] sm:$0xff]
      %v431 = vld [vmem:[%s428 + $0x20] sm:$0xff]
      %v432 = vld [vmem:[%s428 + $0x30] sm:$0xff]
      %v433 = vld [vmem:[%s428 + $0x40] sm:$0xff]
      %v434 = vld [vmem:[%s428 + $0x50] sm:$0xff]
      %v435 = vld [vmem:[%s428 + $0x60] sm:$0xff]
      %v436 = vld [vmem:[%s428 + $0x70] sm:$0xff]
      %v437 = vlaneseq
      %v438 = vshrl.u32 %v437, 7
      %v439 = vsub.s32 0, %v438
      %v440 = vrot.slane %v344, %v439
      %v441 = vmul.f32 %v429, %v440
      %v442 = vmul.f32 %v430, %v440
      %v443 = vmul.f32 %v431, %v440
      %v444 = vmul.f32 %v432, %v440
      %v445 = vmul.f32 %v433, %v440
      %v446 = vmul.f32 %v434, %v440
      %v447 = vmul.f32 %v435, %v440
      %v448 = vmul.f32 %v436, %v440
      %v449 = vadd.f32 %v420, %v441
      %v450 = vadd.f32 %v421, %v442
      %v451 = vadd.f32 %v422, %v443
      %v452 = vadd.f32 %v423, %v444
      %v453 = vadd.f32 %v424, %v445
      %v454 = vadd.f32 %v425, %v446
      %v455 = vadd.f32 %v426, %v447
      %v456 = vadd.f32 %v427, %v448
      %v457 = vld [vmem:[%s428 + $0x1] sm:$0xff]
      %v458 = vld [vmem:[%s428 + $0x11] sm:$0xff]
      %v459 = vld [vmem:[%s428 + $0x21] sm:$0xff]
      %v460 = vld [vmem:[%s428 + $0x31] sm:$0xff]
      %v461 = vld [vmem:[%s428 + $0x41] sm:$0xff]
      %v462 = vld [vmem:[%s428 + $0x51] sm:$0xff]
      %v463 = vld [vmem:[%s428 + $0x61] sm:$0xff]
      %v464 = vld [vmem:[%s428 + $0x71] sm:$0xff]
      %v465 = vlaneseq
      %v466 = vshrl.u32 %v465, 7
      %v467 = vsub.s32 1, %v466
      %v468 = vrot.slane %v344, %v467
      %v469 = vmul.f32 %v457, %v468
      %v470 = vmul.f32 %v458, %v468
      %v471 = vmul.f32 %v459, %v468
      %v472 = vmul.f32 %v460, %v468
      %v473 = vmul.f32 %v461, %v468
      %v474 = vmul.f32 %v462, %v468
      %v475 = vmul.f32 %v463, %v468
      %v476 = vmul.f32 %v464, %v468
      %v477 = vadd.f32 %v449, %v469
      %v478 = vadd.f32 %v450, %v470
      %v479 = vadd.f32 %v451, %v471
      %v480 = vadd.f32 %v452, %v472
      %v481 = vadd.f32 %v453, %v473
      %v482 = vadd.f32 %v454, %v474
      %v483 = vadd.f32 %v455, %v475
      %v484 = vadd.f32 %v456, %v476
      %v485 = vld [vmem:[%s428 + $0x2] sm:$0xff]
      %v486 = vld [vmem:[%s428 + $0x12] sm:$0xff]
      %v487 = vld [vmem:[%s428 + $0x22] sm:$0xff]
      %v488 = vld [vmem:[%s428 + $0x32] sm:$0xff]
      %v489 = vld [vmem:[%s428 + $0x42] sm:$0xff]
      %v490 = vld [vmem:[%s428 + $0x52] sm:$0xff]
      %v491 = vld [vmem:[%s428 + $0x62] sm:$0xff]
      %v492 = vld [vmem:[%s428 + $0x72] sm:$0xff]
      %v493 = vlaneseq
      %v494 = vshrl.u32 %v493, 7
      %v495 = vsub.s32 2, %v494
      %v496 = vrot.slane %v344, %v495
      %v497 = vmul.f32 %v485, %v496
      %v498 = vmul.f32 %v486, %v496
      %v499 = vmul.f32 %v487, %v496
      %v500 = vmul.f32 %v488, %v496
      %v501 = vmul.f32 %v489, %v496
      %v502 = vmul.f32 %v490, %v496
      %v503 = vmul.f32 %v491, %v496
      %v504 = vmul.f32 %v492, %v496
      %v505 = vadd.f32 %v477, %v497
      %v506 = vadd.f32 %v478, %v498
      %v507 = vadd.f32 %v479, %v499
      %v508 = vadd.f32 %v480, %v500
      %v509 = vadd.f32 %v481, %v501
      %v510 = vadd.f32 %v482, %v502
      %v511 = vadd.f32 %v483, %v503
      %v512 = vadd.f32 %v484, %v504
      %s513 = scalar_lea.vmem %s311, 32
      %v514 = vld [vmem:[%s513] sm:$0xff]
      %v515 = vld [vmem:[%s513 + $0x10] sm:$0xff]
      %v516 = vld [vmem:[%s513 + $0x20] sm:$0xff]
      %v517 = vld [vmem:[%s513 + $0x30] sm:$0xff]
      %v518 = vld [vmem:[%s513 + $0x40] sm:$0xff]
      %v519 = vld [vmem:[%s513 + $0x50] sm:$0xff]
      %v520 = vld [vmem:[%s513 + $0x60] sm:$0xff]
      %v521 = vld [vmem:[%s513 + $0x70] sm:$0xff]
      %v522 = vlaneseq
      %v523 = vshrl.u32 %v522, 7
      %v524 = vsub.s32 0, %v523
      %v525 = vrot.slane %v345, %v524
      %v526 = vmul.f32 %v514, %v525
      %v527 = vmul.f32 %v515, %v525
      %v528 = vmul.f32 %v516, %v525
      %v529 = vmul.f32 %v517, %v525
      %v530 = vmul.f32 %v518, %v525
      %v531 = vmul.f32 %v519, %v525
      %v532 = vmul.f32 %v520, %v525
      %v533 = vmul.f32 %v521, %v525
      %v534 = vadd.f32 %v505, %v526
      %v535 = vadd.f32 %v506, %v527
      %v536 = vadd.f32 %v507, %v528
      %v537 = vadd.f32 %v508, %v529
      %v538 = vadd.f32 %v509, %v530
      %v539 = vadd.f32 %v510, %v531
      %v540 = vadd.f32 %v511, %v532
      %v541 = vadd.f32 %v512, %v533
      %v542 = vld [vmem:[%s513 + $0x1] sm:$0xff]
      %v543 = vld [vmem:[%s513 + $0x11] sm:$0xff]
      %v544 = vld [vmem:[%s513 + $0x21] sm:$0xff]
      %v545 = vld [vmem:[%s513 + $0x31] sm:$0xff]
      %v546 = vld [vmem:[%s513 + $0x41] sm:$0xff]
      %v547 = vld [vmem:[%s513 + $0x51] sm:$0xff]
      %v548 = vld [vmem:[%s513 + $0x61] sm:$0xff]
      %v549 = vld [vmem:[%s513 + $0x71] sm:$0xff]
      %v550 = vlaneseq
      %v551 = vshrl.u32 %v550, 7
      %v552 = vsub.s32 1, %v551
      %v553 = vrot.slane %v345, %v552
      %v554 = vmul.f32 %v542, %v553
      %v555 = vmul.f32 %v543, %v553
      %v556 = vmul.f32 %v544, %v553
      %v557 = vmul.f32 %v545, %v553
      %v558 = vmul.f32 %v546, %v553
      %v559 = vmul.f32 %v547, %v553
      %v560 = vmul.f32 %v548, %v553
      %v561 = vmul.f32 %v549, %v553
      %v562 = vadd.f32 %v534, %v554
      %v563 = vadd.f32 %v535, %v555
      %v564 = vadd.f32 %v536, %v556
      %v565 = vadd.f32 %v537, %v557
      %v566 = vadd.f32 %v538, %v558
      %v567 = vadd.f32 %v539, %v559
      %v568 = vadd.f32 %v540, %v560
      %v569 = vadd.f32 %v541, %v561
      %v570 = vld [vmem:[%s513 + $0x2] sm:$0xff]
      %v571 = vld [vmem:[%s513 + $0x12] sm:$0xff]
      %v572 = vld [vmem:[%s513 + $0x22] sm:$0xff]
      %v573 = vld [vmem:[%s513 + $0x32] sm:$0xff]
      %v574 = vld [vmem:[%s513 + $0x42] sm:$0xff]
      %v575 = vld [vmem:[%s513 + $0x52] sm:$0xff]
      %v576 = vld [vmem:[%s513 + $0x62] sm:$0xff]
      %v577 = vld [vmem:[%s513 + $0x72] sm:$0xff]
      %v578 = vlaneseq
      %v579 = vshrl.u32 %v578, 7
      %v580 = vsub.s32 2, %v579
      %v581 = vrot.slane %v345, %v580
      %v582 = vmul.f32 %v570, %v581
      %v583 = vmul.f32 %v571, %v581
      %v584 = vmul.f32 %v572, %v581
      %v585 = vmul.f32 %v573, %v581
      %v586 = vmul.f32 %v574, %v581
      %v587 = vmul.f32 %v575, %v581
      %v588 = vmul.f32 %v576, %v581
      %v589 = vmul.f32 %v577, %v581
      %v590 = vadd.f32 %v562, %v582
      %v591 = vadd.f32 %v563, %v583
      %v592 = vadd.f32 %v564, %v584
      %v593 = vadd.f32 %v565, %v585
      %v594 = vadd.f32 %v566, %v586
      %v595 = vadd.f32 %v567, %v587
      %v596 = vadd.f32 %v568, %v588
      %v597 = vadd.f32 %v569, %v589
      %v598 = vld [vmem:[%s321] sm:$0xff]
      %v599 = vld [vmem:[%s321 + $0x10] sm:$0xff]
      %v600 = vld [vmem:[%s321 + $0x20] sm:$0xff]
      %v601 = vld [vmem:[%s321 + $0x30] sm:$0xff]
      %v602 = vld [vmem:[%s321 + $0x40] sm:$0xff]
      %v603 = vld [vmem:[%s321 + $0x50] sm:$0xff]
      %v604 = vld [vmem:[%s321 + $0x60] sm:$0xff]
      %v605 = vld [vmem:[%s321 + $0x70] sm:$0xff]
      %v606 = vlaneseq
      %v607 = vshrl.u32 %v606, 7
      %v608 = vsub.s32 0, %v607
      %v609 = vrot.slane %v346, %v608
      %v610 = vmul.f32 %v598, %v609
      %v611 = vmul.f32 %v599, %v609
      %v612 = vmul.f32 %v600, %v609
      %v613 = vmul.f32 %v601, %v609
      %v614 = vmul.f32 %v602, %v609
      %v615 = vmul.f32 %v603, %v609
      %v616 = vmul.f32 %v604, %v609
      %v617 = vmul.f32 %v605, %v609
      %v618 = vld [vmem:[%s321 + $0x1] sm:$0xff]
      %v619 = vld [vmem:[%s321 + $0x11] sm:$0xff]
      %v620 = vld [vmem:[%s321 + $0x21] sm:$0xff]
      %v621 = vld [vmem:[%s321 + $0x31] sm:$0xff]
      %v622 = vld [vmem:[%s321 + $0x41] sm:$0xff]
      %v623 = vld [vmem:[%s321 + $0x51] sm:$0xff]
      %v624 = vld [vmem:[%s321 + $0x61] sm:$0xff]
      %v625 = vld [vmem:[%s321 + $0x71] sm:$0xff]
      %v626 = vlaneseq
      %v627 = vshrl.u32 %v626, 7
      %v628 = vsub.s32 1, %v627
      %v629 = vrot.slane %v346, %v628
      %v630 = vmul.f32 %v618, %v629
      %v631 = vmul.f32 %v619, %v629
      %v632 = vmul.f32 %v620, %v629
      %v633 = vmul.f32 %v621, %v629
      %v634 = vmul.f32 %v622, %v629
      %v635 = vmul.f32 %v623, %v629
      %v636 = vmul.f32 %v624, %v629
      %v637 = vmul.f32 %v625, %v629
      %v638 = vadd.f32 %v610, %v630
      %v639 = vadd.f32 %v611, %v631
      %v640 = vadd.f32 %v612, %v632
      %v641 = vadd.f32 %v613, %v633
      %v642 = vadd.f32 %v614, %v634
      %v643 = vadd.f32 %v615, %v635
      %v644 = vadd.f32 %v616, %v636
      %v645 = vadd.f32 %v617, %v637
      %v646 = vld [vmem:[%s321 + $0x2] sm:$0xff]
      %v647 = vld [vmem:[%s321 + $0x12] sm:$0xff]
      %v648 = vld [vmem:[%s321 + $0x22] sm:$0xff]
      %v649 = vld [vmem:[%s321 + $0x32] sm:$0xff]
      %v650 = vld [vmem:[%s321 + $0x42] sm:$0xff]
      %v651 = vld [vmem:[%s321 + $0x52] sm:$0xff]
      %v652 = vld [vmem:[%s321 + $0x62] sm:$0xff]
      %v653 = vld [vmem:[%s321 + $0x72] sm:$0xff]
      %v654 = vlaneseq
      %v655 = vshrl.u32 %v654, 7
      %v656 = vsub.s32 2, %v655
      %v657 = vrot.slane %v346, %v656
      %v658 = vmul.f32 %v646, %v657
      %v659 = vmul.f32 %v647, %v657
      %v660 = vmul.f32 %v648, %v657
      %v661 = vmul.f32 %v649, %v657
      %v662 = vmul.f32 %v650, %v657
      %v663 = vmul.f32 %v651, %v657
      %v664 = vmul.f32 %v652, %v657
      %v665 = vmul.f32 %v653, %v657
      %v666 = vadd.f32 %v638, %v658
      %v667 = vadd.f32 %v639, %v659
      %v668 = vadd.f32 %v640, %v660
      %v669 = vadd.f32 %v641, %v661
      %v670 = vadd.f32 %v642, %v662
      %v671 = vadd.f32 %v643, %v663
      %v672 = vadd.f32 %v644, %v664
      %v673 = vadd.f32 %v645, %v665
      %s674 = scalar_lea.vmem %s321, 16
      %v675 = vld [vmem:[%s674] sm:$0xff]
      %v676 = vld [vmem:[%s674 + $0x10] sm:$0xff]
      %v677 = vld [vmem:[%s674 + $0x20] sm:$0xff]
      %v678 = vld [vmem:[%s674 + $0x30] sm:$0xff]
      %v679 = vld [vmem:[%s674 + $0x40] sm:$0xff]
      %v680 = vld [vmem:[%s674 + $0x50] sm:$0xff]
      %v681 = vld [vmem:[%s674 + $0x60] sm:$0xff]
      %v682 = vld [vmem:[%s674 + $0x70] sm:$0xff]
      %v683 = vlaneseq
      %v684 = vshrl.u32 %v683, 7
      %v685 = vsub.s32 0, %v684
      %v686 = vrot.slane %v347, %v685
      %v687 = vmul.f32 %v675, %v686
      %v688 = vmul.f32 %v676, %v686
      %v689 = vmul.f32 %v677, %v686
      %v690 = vmul.f32 %v678, %v686
      %v691 = vmul.f32 %v679, %v686
      %v692 = vmul.f32 %v680, %v686
      %v693 = vmul.f32 %v681, %v686
      %v694 = vmul.f32 %v682, %v686
      %v695 = vadd.f32 %v666, %v687
      %v696 = vadd.f32 %v667, %v688
      %v697 = vadd.f32 %v668, %v689
      %v698 = vadd.f32 %v669, %v690
      %v699 = vadd.f32 %v670, %v691
      %v700 = vadd.f32 %v671, %v692
      %v701 = vadd.f32 %v672, %v693
      %v702 = vadd.f32 %v673, %v694
      %v703 = vld [vmem:[%s674 + $0x1] sm:$0xff]
      %v704 = vld [vmem:[%s674 + $0x11] sm:$0xff]
      %v705 = vld [vmem:[%s674 + $0x21] sm:$0xff]
      %v706 = vld [vmem:[%s674 + $0x31] sm:$0xff]
      %v707 = vld [vmem:[%s674 + $0x41] sm:$0xff]
      %v708 = vld [vmem:[%s674 + $0x51] sm:$0xff]
      %v709 = vld [vmem:[%s674 + $0x61] sm:$0xff]
      %v710 = vld [vmem:[%s674 + $0x71] sm:$0xff]
      %v711 = vlaneseq
      %v712 = vshrl.u32 %v711, 7
      %v713 = vsub.s32 1, %v712
      %v714 = vrot.slane %v347, %v713
      %v715 = vmul.f32 %v703, %v714
      %v716 = vmul.f32 %v704, %v714
      %v717 = vmul.f32 %v705, %v714
      %v718 = vmul.f32 %v706, %v714
      %v719 = vmul.f32 %v707, %v714
      %v720 = vmul.f32 %v708, %v714
      %v721 = vmul.f32 %v709, %v714
      %v722 = vmul.f32 %v710, %v714
      %v723 = vadd.f32 %v695, %v715
      %v724 = vadd.f32 %v696, %v716
      %v725 = vadd.f32 %v697, %v717
      %v726 = vadd.f32 %v698, %v718
      %v727 = vadd.f32 %v699, %v719
      %v728 = vadd.f32 %v700, %v720
      %v729 = vadd.f32 %v701, %v721
      %v730 = vadd.f32 %v702, %v722
      %v731 = vld [vmem:[%s674 + $0x2] sm:$0xff]
      %v732 = vld [vmem:[%s674 + $0x12] sm:$0xff]
      %v733 = vld [vmem:[%s674 + $0x22] sm:$0xff]
      %v734 = vld [vmem:[%s674 + $0x32] sm:$0xff]
      %v735 = vld [vmem:[%s674 + $0x42] sm:$0xff]
      %v736 = vld [vmem:[%s674 + $0x52] sm:$0xff]
      %v737 = vld [vmem:[%s674 + $0x62] sm:$0xff]
      %v738 = vld [vmem:[%s674 + $0x72] sm:$0xff]
      %v739 = vlaneseq
      %v740 = vshrl.u32 %v739, 7
      %v741 = vsub.s32 2, %v740
      %v742 = vrot.slane %v347, %v741
      %v743 = vmul.f32 %v731, %v742
      %v744 = vmul.f32 %v732, %v742
      %v745 = vmul.f32 %v733, %v742
      %v746 = vmul.f32 %v734, %v742
      %v747 = vmul.f32 %v735, %v742
      %v748 = vmul.f32 %v736, %v742
      %v749 = vmul.f32 %v737, %v742
      %v750 = vmul.f32 %v738, %v742
      %v751 = vadd.f32 %v723, %v743
      %v752 = vadd.f32 %v724, %v744
      %v753 = vadd.f32 %v725, %v745
      %v754 = vadd.f32 %v726, %v746
      %v755 = vadd.f32 %v727, %v747
      %v756 = vadd.f32 %v728, %v748
      %v757 = vadd.f32 %v729, %v749
      %v758 = vadd.f32 %v730, %v750
      %s759 = scalar_lea.vmem %s321, 32
      %v760 = vld [vmem:[%s759] sm:$0xff]
      %v761 = vld [vmem:[%s759 + $0x10] sm:$0xff]
      %v762 = vld [vmem:[%s759 + $0x20] sm:$0xff]
      %v763 = vld [vmem:[%s759 + $0x30] sm:$0xff]
      %v764 = vld [vmem:[%s759 + $0x40] sm:$0xff]
      %v765 = vld [vmem:[%s759 + $0x50] sm:$0xff]
      %v766 = vld [vmem:[%s759 + $0x60] sm:$0xff]
      %v767 = vld [vmem:[%s759 + $0x70] sm:$0xff]
      %v768 = vlaneseq
      %v769 = vshrl.u32 %v768, 7
      %v770 = vsub.s32 0, %v769
      %v771 = vrot.slane %v348, %v770
      %v772 = vmul.f32 %v760, %v771
      %v773 = vmul.f32 %v761, %v771
      %v774 = vmul.f32 %v762, %v771
      %v775 = vmul.f32 %v763, %v771
      %v776 = vmul.f32 %v764, %v771
      %v777 = vmul.f32 %v765, %v771
      %v778 = vmul.f32 %v766, %v771
      %v779 = vmul.f32 %v767, %v771
      %v780 = vadd.f32 %v751, %v772
      %v781 = vadd.f32 %v752, %v773
      %v782 = vadd.f32 %v753, %v774
      %v783 = vadd.f32 %v754, %v775
      %v784 = vadd.f32 %v755, %v776
      %v785 = vadd.f32 %v756, %v777
      %v786 = vadd.f32 %v757, %v778
      %v787 = vadd.f32 %v758, %v779
      %v788 = vld [vmem:[%s759 + $0x1] sm:$0xff]
      %v789 = vld [vmem:[%s759 + $0x11] sm:$0xff]
      %v790 = vld [vmem:[%s759 + $0x21] sm:$0xff]
      %v791 = vld [vmem:[%s759 + $0x31] sm:$0xff]
      %v792 = vld [vmem:[%s759 + $0x41] sm:$0xff]
      %v793 = vld [vmem:[%s759 + $0x51] sm:$0xff]
      %v794 = vld [vmem:[%s759 + $0x61] sm:$0xff]
      %v795 = vld [vmem:[%s759 + $0x71] sm:$0xff]
      %v796 = vlaneseq
      %v797 = vshrl.u32 %v796, 7
      %v798 = vsub.s32 1, %v797
      %v799 = vrot.slane %v348, %v798
      %v800 = vmul.f32 %v788, %v799
      %v801 = vmul.f32 %v789, %v799
      %v802 = vmul.f32 %v790, %v799
      %v803 = vmul.f32 %v791, %v799
      %v804 = vmul.f32 %v792, %v799
      %v805 = vmul.f32 %v793, %v799
      %v806 = vmul.f32 %v794, %v799
      %v807 = vmul.f32 %v795, %v799
      %v808 = vadd.f32 %v780, %v800
      %v809 = vadd.f32 %v781, %v801
      %v810 = vadd.f32 %v782, %v802
      %v811 = vadd.f32 %v783, %v803
      %v812 = vadd.f32 %v784, %v804
      %v813 = vadd.f32 %v785, %v805
      %v814 = vadd.f32 %v786, %v806
      %v815 = vadd.f32 %v787, %v807
      %v816 = vld [vmem:[%s759 + $0x2] sm:$0xff]
      %v817 = vld [vmem:[%s759 + $0x12] sm:$0xff]
      %v818 = vld [vmem:[%s759 + $0x22] sm:$0xff]
      %v819 = vld [vmem:[%s759 + $0x32] sm:$0xff]
      %v820 = vld [vmem:[%s759 + $0x42] sm:$0xff]
      %v821 = vld [vmem:[%s759 + $0x52] sm:$0xff]
      %v822 = vld [vmem:[%s759 + $0x62] sm:$0xff]
      %v823 = vld [vmem:[%s759 + $0x72] sm:$0xff]
      %v824 = vlaneseq
      %v825 = vshrl.u32 %v824, 7
      %v826 = vsub.s32 2, %v825
      %v827 = vrot.slane %v348, %v826
      %v828 = vmul.f32 %v816, %v827
      %v829 = vmul.f32 %v817, %v827
      %v830 = vmul.f32 %v818, %v827
      %v831 = vmul.f32 %v819, %v827
      %v832 = vmul.f32 %v820, %v827
      %v833 = vmul.f32 %v821, %v827
      %v834 = vmul.f32 %v822, %v827
      %v835 = vmul.f32 %v823, %v827
      %v836 = vadd.f32 %v808, %v828
      %v837 = vadd.f32 %v809, %v829
      %v838 = vadd.f32 %v810, %v830
      %v839 = vadd.f32 %v811, %v831
      %v840 = vadd.f32 %v812, %v832
      %v841 = vadd.f32 %v813, %v833
      %v842 = vadd.f32 %v814, %v834
      %v843 = vadd.f32 %v815, %v835
      %v844 = vld [vmem:[%s332] sm:$0xff]
      %v845 = vld [vmem:[%s332 + $0x10] sm:$0xff]
      %v846 = vld [vmem:[%s332 + $0x20] sm:$0xff]
      %v847 = vld [vmem:[%s332 + $0x30] sm:$0xff]
      %v848 = vld [vmem:[%s332 + $0x40] sm:$0xff]
      %v849 = vld [vmem:[%s332 + $0x50] sm:$0xff]
      %v850 = vld [vmem:[%s332 + $0x60] sm:$0xff]
      %v851 = vld [vmem:[%s332 + $0x70] sm:$0xff]
      %v852 = vlaneseq
      %v853 = vshrl.u32 %v852, 7
      %v854 = vsub.s32 0, %v853
      %v855 = vrot.slane %v349, %v854
      %v856 = vmul.f32 %v844, %v855
      %v857 = vmul.f32 %v845, %v855
      %v858 = vmul.f32 %v846, %v855
      %v859 = vmul.f32 %v847, %v855
      %v860 = vmul.f32 %v848, %v855
      %v861 = vmul.f32 %v849, %v855
      %v862 = vmul.f32 %v850, %v855
      %v863 = vmul.f32 %v851, %v855
      %v864 = vld [vmem:[%s332 + $0x1] sm:$0xff]
      %v865 = vld [vmem:[%s332 + $0x11] sm:$0xff]
      %v866 = vld [vmem:[%s332 + $0x21] sm:$0xff]
      %v867 = vld [vmem:[%s332 + $0x31] sm:$0xff]
      %v868 = vld [vmem:[%s332 + $0x41] sm:$0xff]
      %v869 = vld [vmem:[%s332 + $0x51] sm:$0xff]
      %v870 = vld [vmem:[%s332 + $0x61] sm:$0xff]
      %v871 = vld [vmem:[%s332 + $0x71] sm:$0xff]
      %v872 = vlaneseq
      %v873 = vshrl.u32 %v872, 7
      %v874 = vsub.s32 1, %v873
      %v875 = vrot.slane %v349, %v874
      %v876 = vmul.f32 %v864, %v875
      %v877 = vmul.f32 %v865, %v875
      %v878 = vmul.f32 %v866, %v875
      %v879 = vmul.f32 %v867, %v875
      %v880 = vmul.f32 %v868, %v875
      %v881 = vmul.f32 %v869, %v875
      %v882 = vmul.f32 %v870, %v875
      %v883 = vmul.f32 %v871, %v875
      %v884 = vadd.f32 %v856, %v876
      %v885 = vadd.f32 %v857, %v877
      %v886 = vadd.f32 %v858, %v878
      %v887 = vadd.f32 %v859, %v879
      %v888 = vadd.f32 %v860, %v880
      %v889 = vadd.f32 %v861, %v881
      %v890 = vadd.f32 %v862, %v882
      %v891 = vadd.f32 %v863, %v883
      %v892 = vld [vmem:[%s332 + $0x2] sm:$0xff]
      %v893 = vld [vmem:[%s332 + $0x12] sm:$0xff]
      %v894 = vld [vmem:[%s332 + $0x22] sm:$0xff]
      %v895 = vld [vmem:[%s332 + $0x32] sm:$0xff]
      %v896 = vld [vmem:[%s332 + $0x42] sm:$0xff]
      %v897 = vld [vmem:[%s332 + $0x52] sm:$0xff]
      %v898 = vld [vmem:[%s332 + $0x62] sm:$0xff]
      %v899 = vld [vmem:[%s332 + $0x72] sm:$0xff]
      %v900 = vlaneseq
      %v901 = vshrl.u32 %v900, 7
      %v902 = vsub.s32 2, %v901
      %v903 = vrot.slane %v349, %v902
      %v904 = vmul.f32 %v892, %v903
      %v905 = vmul.f32 %v893, %v903
      %v906 = vmul.f32 %v894, %v903
      %v907 = vmul.f32 %v895, %v903
      %v908 = vmul.f32 %v896, %v903
      %v909 = vmul.f32 %v897, %v903
      %v910 = vmul.f32 %v898, %v903
      %v911 = vmul.f32 %v899, %v903
      %v912 = vadd.f32 %v884, %v904
      %v913 = vadd.f32 %v885, %v905
      %v914 = vadd.f32 %v886, %v906
      %v915 = vadd.f32 %v887, %v907
      %v916 = vadd.f32 %v888, %v908
      %v917 = vadd.f32 %v889, %v909
      %v918 = vadd.f32 %v890, %v910
      %v919 = vadd.f32 %v891, %v911
      %s920 = scalar_lea.vmem %s332, 16
      %v921 = vld [vmem:[%s920] sm:$0xff]
      %v922 = vld [vmem:[%s920 + $0x10] sm:$0xff]
      %v923 = vld [vmem:[%s920 + $0x20] sm:$0xff]
      %v924 = vld [vmem:[%s920 + $0x30] sm:$0xff]
      %v925 = vld [vmem:[%s920 + $0x40] sm:$0xff]
      %v926 = vld [vmem:[%s920 + $0x50] sm:$0xff]
      %v927 = vld [vmem:[%s920 + $0x60] sm:$0xff]
      %v928 = vld [vmem:[%s920 + $0x70] sm:$0xff]
      %v929 = vlaneseq
      %v930 = vshrl.u32 %v929, 7
      %v931 = vsub.s32 0, %v930
      %v932 = vrot.slane %v350, %v931
      %v933 = vmul.f32 %v921, %v932
      %v934 = vmul.f32 %v922, %v932
      %v935 = vmul.f32 %v923, %v932
      %v936 = vmul.f32 %v924, %v932
      %v937 = vmul.f32 %v925, %v932
      %v938 = vmul.f32 %v926, %v932
      %v939 = vmul.f32 %v927, %v932
      %v940 = vmul.f32 %v928, %v932
      %v941 = vadd.f32 %v912, %v933
      %v942 = vadd.f32 %v913, %v934
      %v943 = vadd.f32 %v914, %v935
      %v944 = vadd.f32 %v915, %v936
      %v945 = vadd.f32 %v916, %v937
      %v946 = vadd.f32 %v917, %v938
      %v947 = vadd.f32 %v918, %v939
      %v948 = vadd.f32 %v919, %v940
      %v949 = vld [vmem:[%s920 + $0x1] sm:$0xff]
      %v950 = vld [vmem:[%s920 + $0x11] sm:$0xff]
      %v951 = vld [vmem:[%s920 + $0x21] sm:$0xff]
      %v952 = vld [vmem:[%s920 + $0x31] sm:$0xff]
      %v953 = vld [vmem:[%s920 + $0x41] sm:$0xff]
      %v954 = vld [vmem:[%s920 + $0x51] sm:$0xff]
      %v955 = vld [vmem:[%s920 + $0x61] sm:$0xff]
      %v956 = vld [vmem:[%s920 + $0x71] sm:$0xff]
      %v957 = vlaneseq
      %v958 = vshrl.u32 %v957, 7
      %v959 = vsub.s32 1, %v958
      %v960 = vrot.slane %v350, %v959
      %v961 = vmul.f32 %v949, %v960
      %v962 = vmul.f32 %v950, %v960
      %v963 = vmul.f32 %v951, %v960
      %v964 = vmul.f32 %v952, %v960
      %v965 = vmul.f32 %v953, %v960
      %v966 = vmul.f32 %v954, %v960
      %v967 = vmul.f32 %v955, %v960
      %v968 = vmul.f32 %v956, %v960
      %v969 = vadd.f32 %v941, %v961
      %v970 = vadd.f32 %v942, %v962
      %v971 = vadd.f32 %v943, %v963
      %v972 = vadd.f32 %v944, %v964
      %v973 = vadd.f32 %v945, %v965
      %v974 = vadd.f32 %v946, %v966
      %v975 = vadd.f32 %v947, %v967
      %v976 = vadd.f32 %v948, %v968
      %v977 = vld [vmem:[%s920 + $0x2] sm:$0xff]
      %v978 = vld [vmem:[%s920 + $0x12] sm:$0xff]
      %v979 = vld [vmem:[%s920 + $0x22] sm:$0xff]
      %v980 = vld [vmem:[%s920 + $0x32] sm:$0xff]
      %v981 = vld [vmem:[%s920 + $0x42] sm:$0xff]
      %v982 = vld [vmem:[%s920 + $0x52] sm:$0xff]
      %v983 = vld [vmem:[%s920 + $0x62] sm:$0xff]
      %v984 = vld [vmem:[%s920 + $0x72] sm:$0xff]
      %v985 = vlaneseq
      %v986 = vshrl.u32 %v985, 7
      %v987 = vsub.s32 2, %v986
      %v988 = vrot.slane %v350, %v987
      %v989 = vmul.f32 %v977, %v988
      %v990 = vmul.f32 %v978, %v988
      %v991 = vmul.f32 %v979, %v988
      %v992 = vmul.f32 %v980, %v988
      %v993 = vmul.f32 %v981, %v988
      %v994 = vmul.f32 %v982, %v988
      %v995 = vmul.f32 %v983, %v988
      %v996 = vmul.f32 %v984, %v988
      %v997 = vadd.f32 %v969, %v989
      %v998 = vadd.f32 %v970, %v990
      %v999 = vadd.f32 %v971, %v991
      %v1000 = vadd.f32 %v972, %v992
      %v1001 = vadd.f32 %v973, %v993
      %v1002 = vadd.f32 %v974, %v994
      %v1003 = vadd.f32 %v975, %v995
      %v1004 = vadd.f32 %v976, %v996
      %s1005 = scalar_lea.vmem %s332, 32
      %v1006 = vld [vmem:[%s1005] sm:$0xff]
      %v1007 = vld [vmem:[%s1005 + $0x10] sm:$0xff]
      %v1008 = vld [vmem:[%s1005 + $0x20] sm:$0xff]
      %v1009 = vld [vmem:[%s1005 + $0x30] sm:$0xff]
      %v1010 = vld [vmem:[%s1005 + $0x40] sm:$0xff]
      %v1011 = vld [vmem:[%s1005 + $0x50] sm:$0xff]
      %v1012 = vld [vmem:[%s1005 + $0x60] sm:$0xff]
      %v1013 = vld [vmem:[%s1005 + $0x70] sm:$0xff]
      %v1014 = vlaneseq
      %v1015 = vshrl.u32 %v1014, 7
      %v1016 = vsub.s32 0, %v1015
      %v1017 = vrot.slane %v351, %v1016
      %v1018 = vmul.f32 %v1006, %v1017
      %v1019 = vmul.f32 %v1007, %v1017
      %v1020 = vmul.f32 %v1008, %v1017
      %v1021 = vmul.f32 %v1009, %v1017
      %v1022 = vmul.f32 %v1010, %v1017
      %v1023 = vmul.f32 %v1011, %v1017
      %v1024 = vmul.f32 %v1012, %v1017
      %v1025 = vmul.f32 %v1013, %v1017
      %v1026 = vadd.f32 %v997, %v1018
      %v1027 = vadd.f32 %v998, %v1019
      %v1028 = vadd.f32 %v999, %v1020
      %v1029 = vadd.f32 %v1000, %v1021
      %v1030 = vadd.f32 %v1001, %v1022
      %v1031 = vadd.f32 %v1002, %v1023
      %v1032 = vadd.f32 %v1003, %v1024
      %v1033 = vadd.f32 %v1004, %v1025
      %v1034 = vld [vmem:[%s1005 + $0x1] sm:$0xff]
      %v1035 = vld [vmem:[%s1005 + $0x11] sm:$0xff]
      %v1036 = vld [vmem:[%s1005 + $0x21] sm:$0xff]
      %v1037 = vld [vmem:[%s1005 + $0x31] sm:$0xff]
      %v1038 = vld [vmem:[%s1005 + $0x41] sm:$0xff]
      %v1039 = vld [vmem:[%s1005 + $0x51] sm:$0xff]
      %v1040 = vld [vmem:[%s1005 + $0x61] sm:$0xff]
      %v1041 = vld [vmem:[%s1005 + $0x71] sm:$0xff]
      %v1042 = vlaneseq
      %v1043 = vshrl.u32 %v1042, 7
      %v1044 = vsub.s32 1, %v1043
      %v1045 = vrot.slane %v351, %v1044
      %v1046 = vmul.f32 %v1034, %v1045
      %v1047 = vmul.f32 %v1035, %v1045
      %v1048 = vmul.f32 %v1036, %v1045
      %v1049 = vmul.f32 %v1037, %v1045
      %v1050 = vmul.f32 %v1038, %v1045
      %v1051 = vmul.f32 %v1039, %v1045
      %v1052 = vmul.f32 %v1040, %v1045
      %v1053 = vmul.f32 %v1041, %v1045
      %v1054 = vadd.f32 %v1026, %v1046
      %v1055 = vadd.f32 %v1027, %v1047
      %v1056 = vadd.f32 %v1028, %v1048
      %v1057 = vadd.f32 %v1029, %v1049
      %v1058 = vadd.f32 %v1030, %v1050
      %v1059 = vadd.f32 %v1031, %v1051
      %v1060 = vadd.f32 %v1032, %v1052
      %v1061 = vadd.f32 %v1033, %v1053
      %v1062 = vld [vmem:[%s1005 + $0x2] sm:$0xff]
      %v1063 = vld [vmem:[%s1005 + $0x12] sm:$0xff]
      %v1064 = vld [vmem:[%s1005 + $0x22] sm:$0xff]
      %v1065 = vld [vmem:[%s1005 + $0x32] sm:$0xff]
      %v1066 = vld [vmem:[%s1005 + $0x42] sm:$0xff]
      %v1067 = vld [vmem:[%s1005 + $0x52] sm:$0xff]
      %v1068 = vld [vmem:[%s1005 + $0x62] sm:$0xff]
      %v1069 = vld [vmem:[%s1005 + $0x72] sm:$0xff]
      %v1070 = vlaneseq
      %v1071 = vshrl.u32 %v1070, 7
      %v1072 = vsub.s32 2, %v1071
      %v1073 = vrot.slane %v351, %v1072
      %v1074 = vmul.f32 %v1062, %v1073
      %v1075 = vmul.f32 %v1063, %v1073
      %v1076 = vmul.f32 %v1064, %v1073
      %v1077 = vmul.f32 %v1065, %v1073
      %v1078 = vmul.f32 %v1066, %v1073
      %v1079 = vmul.f32 %v1067, %v1073
      %v1080 = vmul.f32 %v1068, %v1073
      %v1081 = vmul.f32 %v1069, %v1073
      %v1082 = vadd.f32 %v1054, %v1074
      %v1083 = vadd.f32 %v1055, %v1075
      %v1084 = vadd.f32 %v1056, %v1076
      %v1085 = vadd.f32 %v1057, %v1077
      %v1086 = vadd.f32 %v1058, %v1078
      %v1087 = vadd.f32 %v1059, %v1079
      %v1088 = vadd.f32 %v1060, %v1080
      %v1089 = vadd.f32 %v1061, %v1081
      %v1090 = vld [vmem:[%s4] sm:$0x1]
      %v1091 = vadd.f32 %v590, %v836
      %v1092 = vadd.f32 %v591, %v837
      %v1093 = vadd.f32 %v592, %v838
      %v1094 = vadd.f32 %v593, %v839
      %v1095 = vadd.f32 %v594, %v840
      %v1096 = vadd.f32 %v595, %v841
      %v1097 = vadd.f32 %v596, %v842
      %v1098 = vadd.f32 %v597, %v843
      %v1100 = vlaneseq
      %v1101 = vshrl.u32 %v1100, 7
      %v1102 = vsub.s32 0, %v1101
      %v1103 = vrot.slane %v1090, %v1102
      %v1105 = vadd.f32 %v1082, %v1103
      %v1106 = vadd.f32 %v1083, %v1103
      %v1107 = vadd.f32 %v1084, %v1103
      %v1108 = vadd.f32 %v1085, %v1103
      %v1109 = vadd.f32 %v1086, %v1103
      %v1110 = vadd.f32 %v1087, %v1103
      %v1111 = vadd.f32 %v1088, %v1103
      %v1112 = vadd.f32 %v1089, %v1103
      %v1113 = vadd.f32 %v1091, %v1105
      %v1114 = vadd.f32 %v1092, %v1106
      %v1115 = vadd.f32 %v1093, %v1107
      %v1116 = vadd.f32 %v1094, %v1108
      %v1117 = vadd.f32 %v1095, %v1109
      %v1118 = vadd.f32 %v1096, %v1110
      %v1119 = vadd.f32 %v1097, %v1111
      %v1120 = vadd.f32 %v1098, %v1112
      %1121 = vst [vmem:[%s342] sm:$0xff] %v1113
      %1122 = vst [vmem:[%s342 + $0x8] sm:$0xff] %v1114
      %1123 = vst [vmem:[%s342 + $0x10] sm:$0xff] %v1115
      %1124 = vst [vmem:[%s342 + $0x18] sm:$0xff] %v1116
      %1125 = vst [vmem:[%s342 + $0x20] sm:$0xff] %v1117
      %1126 = vst [vmem:[%s342 + $0x28] sm:$0xff] %v1118
      %1127 = vst [vmem:[%s342 + $0x30] sm:$0xff] %v1119
      %1128 = vst [vmem:[%s342 + $0x38] sm:$0xff] %v1120
      %p1129 = scmp.lt.s32.totalorder %s20, 1
      %s1130 = scalar_select %p1129, %s20, 1
      %p1131 = scmp.lt.s32.totalorder %s21, 3
      %s1132 = scalar_select %p1131, %s21, 3
      %s1133 = smul.addr %s1132, 8
      %s1134 = smul.addr %s1130, 32
      %s1135 = sadd.s32 %s1133, %s1134
      %s1136 = smul.addr %s1135, 8
      %s1137 = scalar_lea.vmem %s5, %s1136
      // Predicated region
      $region41: #{dwconv3d.1} parent=39 // pred_check
        %p1138 = pneg %p178
      $region42: #{dwconv3d.1} parent=39 // pred_check_branch
        %1140 = sbr.rel (%p1138) target = $region44
      $region43: #{dwconv3d.1} parent=39 // pred_region
        _
      $region44: #{dwconv3d.1} parent=39 // pred_fallthru
        _
    $region40: #{dwconv3d.1} parent=5 // pred_fallthru
      _
    %p1141 = scmp.le.s32.totalorder 2, %s11
    // Predicated region
    $region45: #{dwconv3d.1} parent=5 // pred_check
      %p1142 = pneg %p1141
    $region46: #{dwconv3d.1} parent=5 // pred_check_branch
      %1144 = sbr.rel (%p1142) target = $region48
    $region47: #{dwconv3d.1} parent=5 // pred_region
      %s1145 = ssub.s32 %s11, 2
      // Predicated region
      $region49: #{dwconv3d.1} parent=47 // pred_check
        %p1146 = pneg %p184
      $region50: #{dwconv3d.1} parent=47 // pred_check_branch
        %1148 = sbr.rel (%p1146) target = $region52
      $region51: #{dwconv3d.1} parent=47 // pred_region
        %p1149 = scmp.lt.s32.totalorder %s22, 1
        %s1150 = scalar_select %p1149, %s22, 1
        %p1151 = scmp.lt.s32.totalorder %s23, 3
        %s1152 = scalar_select %p1151, %s23, 3
        %s1153 = smul.addr %s1152, 8
        %s1154 = smul.addr %s1150, 32
        %s1155 = sadd.s32 %s1153, %s1154
        %s1156 = smul.addr %s1155, 8
        %s1157 = scalar_lea.vmem %s5, %s1156
      $region52: #{dwconv3d.1} parent=47 // pred_fallthru
        _
    $region48: #{dwconv3d.1} parent=5 // pred_fallthru
      _
  $region6: #{dwconv3d.1} parent=0 // loop_footer
    %s15 = sadd.s32 1, %s11
  $region7: #{dwconv3d.1} parent=0 // loop_footer_branch
    %10 = sbr.rel target = $region3
  $region8: #{dwconv3d.1} parent=0 // loop_exit
    _

</llo_original>
